<compile_context>
chip_gen: v5e
topology: v5e:2x2
jax: 0.10.0
libtpu: 0.0.40
codegen_flags: <defaults>
</compile_context>

<pallas_src>
import math

import jax
import jax.numpy as jnp
import numpy as np
from jax.experimental import pallas as pl
from jax.experimental.pallas import tpu as pltpu


# --------------------------------------------------------------------------
# Pallas kernel: fused bidirectional LSTM recurrence (time loop in-kernel)
# --------------------------------------------------------------------------
def _bilstm_kernel(g_ref, whh_ref, out_ref, h_ref, c_ref):
    """Fused forward+backward LSTM recurrence.

    g_ref   : (T, B, 8H)  precomputed input projections + biases for both
                          directions, gate-major column layout
                          [i_f i_b f_f f_b g_f g_b o_f o_b].  Row s already
                          holds the forward projection at time s and the
                          backward projection at time T-1-s (alignment done
                          once in the wrapper).
    whh_ref : (2H, 8H)    block-diagonal recurrent weights (same column order).
    out_ref : (T, B, 2H)  per-step hidden states, kernel-time-major:
                          row s = [h_fwd(t=s) | h_bwd(t=T-1-s)].
    h_ref   : (B, 2H)     final hidden state [fwd | bwd].
    c_ref   : (B, 2H)     final cell state  [fwd | bwd].
    """
    T, B, G8 = g_ref.shape
    H = G8 // 8
    H2 = 2 * H

    whh = whh_ref[...]                                    # resident in vregs

    def step(s, carry):
        h, c = carry                                      # (B, 2H) = [fwd | bwd]
        # Single MXU dot per step covering both directions.
        rec = jnp.dot(h, whh, preferred_element_type=jnp.float32)   # (B, 8H)
        pre = g_ref[s] + rec                              # (B, 8H), one load

        i_g = jax.nn.sigmoid(pre[:, 0 * H2:1 * H2])       # (B, 2H)
        f_g = jax.nn.sigmoid(pre[:, 1 * H2:2 * H2])
        g_g = jnp.tanh(pre[:, 2 * H2:3 * H2])
        o_g = jax.nn.sigmoid(pre[:, 3 * H2:4 * H2])

        c_new = f_g * c + i_g * g_g                       # (B, 2H)
        h_new = o_g * jnp.tanh(c_new)                     # (B, 2H)

        out_ref[s] = h_new                                # single store / step
        return h_new, c_new

    zeros = jnp.zeros((B, H2), jnp.float32)
    h_fin, c_fin = jax.lax.fori_loop(0, T, step, (zeros, zeros), unroll=True)

    # Final states written exactly once, after the loop.
    h_ref[...] = h_fin
    c_ref[...] = c_fin


# --------------------------------------------------------------------------
# Weight-layout helpers (done once, outside the recurrence)
# --------------------------------------------------------------------------
def _interleave_gate_cols(m_f, m_b, H):
    """Interleave torch-order [i|f|g|o] columns of the two directions into
    gate-major layout [i_f i_b | f_f f_b | g_f g_b | o_f o_b]."""
    parts = []
    for k in range(4):
        parts.append(m_f[..., k * H:(k + 1) * H])
        parts.append(m_b[..., k * H:(k + 1) * H])
    return jnp.concatenate(parts, axis=-1)


def _build_recurrent_weight(w_hh_f, w_hh_b, H):
    """Block-diagonal (2H, 8H) recurrent weight in gate-major column order."""
    wf = jnp.asarray(w_hh_f, jnp.float32).T               # (H, 4H)
    wb = jnp.asarray(w_hh_b, jnp.float32).T               # (H, 4H)
    z = jnp.zeros((H, H), jnp.float32)
    blocks = []
    for k in range(4):
        top = jnp.concatenate([wf[:, k * H:(k + 1) * H], z], axis=1)   # (H, 2H)
        bot = jnp.concatenate([z, wb[:, k * H:(k + 1) * H]], axis=1)   # (H, 2H)
        blocks.append(jnp.concatenate([top, bot], axis=0))             # (2H, 2H)
    return jnp.concatenate(blocks, axis=1)                             # (2H, 8H)


# --------------------------------------------------------------------------
# Parameter init (matches nn.LSTM bidirectional parameter shapes)
# --------------------------------------------------------------------------
def init_encoder_params(key, input_size, hidden_size):
    bound = 1.0 / math.sqrt(hidden_size)
    names = ["w_ih_f", "w_hh_f", "b_ih_f", "b_hh_f",
             "w_ih_b", "w_hh_b", "b_ih_b", "b_hh_b"]
    shapes = [(4 * hidden_size, input_size), (4 * hidden_size, hidden_size),
              (4 * hidden_size,), (4 * hidden_size,)] * 2
    keys = jax.random.split(key, len(names))
    return {n: jax.random.uniform(k, s, jnp.float32, -bound, bound)
            for n, k, s in zip(names, keys, shapes)}


# --------------------------------------------------------------------------
# Forward pass (matches Encoder.forward)
# --------------------------------------------------------------------------
def encoder_forward(params, input_data, y_history):
    """input_data (B,T,F_in), y_history (B,T,F_y); F_in+F_y == input_size.
    Returns (input_encoded (B,T,2H), hidden (2,B,H), cell (2,B,H))."""
    H = params["w_hh_f"].shape[1]

    x = jnp.concatenate([input_data, y_history], axis=2)          # (B, T, F)
    x_seq = jnp.transpose(x, (1, 0, 2)).astype(jnp.float32)       # (T, B, F)
    T, B, _ = x_seq.shape

    # Hoisted input projection: one lane-dense matmul for both directions
    # (8H output lanes), biases folded in.
    wih_comb = _interleave_gate_cols(
        jnp.asarray(params["w_ih_f"], jnp.float32).T,
        jnp.asarray(params["w_ih_b"], jnp.float32).T, H)          # (F, 8H)
    bias_comb = _interleave_gate_cols(
        params["b_ih_f"] + params["b_hh_f"],
        params["b_ih_b"] + params["b_hh_b"], H)                   # (8H,)
    g_all = jnp.einsum("tbf,fg->tbg", x_seq, wih_comb) + bias_comb  # (T, B, 8H)

    # Pre-align forward/backward time indices outside the sequential loop:
    # forward gate columns (even H-blocks) read time s, backward gate columns
    # (odd H-blocks) read time T-1-s.  Done once in parallel here so the
    # kernel does a single load per step.
    col = jnp.arange(8 * H)
    fwd_mask = ((col // H) % 2) == 0                              # (8H,)
    g_comb = jnp.where(fwd_mask[None, None, :], g_all, g_all[::-1])

    whh_comb = _build_recurrent_weight(params["w_hh_f"], params["w_hh_b"], H)

    vmem = pltpu.MemorySpace.VMEM
    out_k, h_fin, c_fin = pl.pallas_call(
        _bilstm_kernel,
        out_shape=(
            jax.ShapeDtypeStruct((T, B, 2 * H), jnp.float32),  # per-step hiddens
            jax.ShapeDtypeStruct((B, 2 * H), jnp.float32),     # final hidden
            jax.ShapeDtypeStruct((B, 2 * H), jnp.float32),     # final cell
        ),
        in_specs=[pl.BlockSpec(memory_space=vmem),
                  pl.BlockSpec(memory_space=vmem)],
        out_specs=(pl.BlockSpec(memory_space=vmem),
                   pl.BlockSpec(memory_space=vmem),
                   pl.BlockSpec(memory_space=vmem)),
    )(g_comb, whh_comb)

    # Un-reverse the backward half (out_k row s holds bwd hidden for time
    # T-1-s), concat, and go back to batch-major.  Tiny parallel XLA ops.
    enc_seq = jnp.concatenate([out_k[:, :, :H], out_k[::-1, :, H:]], axis=-1)
    input_encoded = jnp.transpose(enc_seq, (1, 0, 2))             # (B, T, 2H)

    hidden = jnp.transpose(h_fin.reshape(B, 2, H), (1, 0, 2))     # (2, B, H)
    cell = jnp.transpose(c_fin.reshape(B, 2, H), (1, 0, 2))       # (2, B, H)
    return input_encoded, hidden, cell


# --------------------------------------------------------------------------
# Pure-JAX reference (for correctness check only)
# --------------------------------------------------------------------------
def _ref_lstm_dir(x_seq, w_ih, w_hh, b_ih, b_hh):
    T, B, _ = x_seq.shape
    H = w_hh.shape[1]

    def step(carry, x_t):
        h, c = carry
        gates = x_t @ w_ih.T + h @ w_hh.T + b_ih + b_hh
        i = jax.nn.sigmoid(gates[:, 0 * H:1 * H])
        f = jax.nn.sigmoid(gates[:, 1 * H:2 * H])
        g = jnp.tanh(gates[:, 2 * H:3 * H])
        o = jax.nn.sigmoid(gates[:, 3 * H:4 * H])
        c_new = f * c + i * g
        h_new = o * jnp.tanh(c_new)
        return (h_new, c_new), h_new

    init = (jnp.zeros((B, H), jnp.float32), jnp.zeros((B, H), jnp.float32))
    (hT, cT), out = jax.lax.scan(step, init, x_seq)
    return out, hT, cT


def encoder_forward_ref(params, input_data, y_history):
    x = jnp.concatenate([input_data, y_history], axis=2)
    x_seq = jnp.transpose(x, (1, 0, 2)).astype(jnp.float32)
    out_f, hT_f, cT_f = _ref_lstm_dir(
        x_seq, params["w_ih_f"], params["w_hh_f"],
        params["b_ih_f"], params["b_hh_f"])
    out_b_rev, hT_b, cT_b = _ref_lstm_dir(
        x_seq[::-1], params["w_ih_b"], params["w_hh_b"],
        params["b_ih_b"], params["b_hh_b"])
    out_b = out_b_rev[::-1]
    enc = jnp.transpose(jnp.concatenate([out_f, out_b], axis=-1), (1, 0, 2))
    return enc, jnp.stack([hT_f, hT_b]), jnp.stack([cT_f, cT_b])


if __name__ == "__main__":
    # Encoder(input_size=5, hidden_size=16, T=24); period = T // 24 = 1 is
    # unused in forward.  input_data has 4 driving features, y_history 1, so
    # the concatenated feature dim equals input_size = 5.
    B, T = 2, 24
    F_in, F_y = 4, 1
    input_size, hidden_size = F_in + F_y, 16

    key = jax.random.PRNGKey(0)
    k_par, k_x, k_y = jax.random.split(key, 3)

    params = init_encoder_params(k_par, input_size, hidden_size)
    input_data = jax.random.normal(k_x, (B, T, F_in), jnp.float32)
    y_history = jax.random.normal(k_y, (B, T, F_y), jnp.float32)

    fwd = jax.jit(encoder_forward)
    enc, hidden, cell = fwd(params, input_data, y_history)
    jax.block_until_ready((enc, hidden, cell))

    assert enc.shape == (B, T, 2 * hidden_size)
    assert hidden.shape == (2, B, hidden_size)
    assert cell.shape == (2, B, hidden_size)

    enc_r, hid_r, cell_r = encoder_forward_ref(params, input_data, y_history)
    np.testing.assert_allclose(np.asarray(enc), np.asarray(enc_r),
                               rtol=1e-5, atol=1e-5)
    np.testing.assert_allclose(np.asarray(hidden), np.asarray(hid_r),
                               rtol=1e-5, atol=1e-5)
    np.testing.assert_allclose(np.asarray(cell), np.asarray(cell_r),
                               rtol=1e-5, atol=1e-5)

    print("KERNEL_OK")
</pallas_src>

<mosaic_0001>
module attributes {stable_mosaic.version = 11 : i64} {
  func.func @_bilstm_kernel(%arg0: memref<24x2x128xf32, #tpu.memory_space<vmem>>, %arg1: memref<32x128xf32, #tpu.memory_space<vmem>>, %arg2: memref<24x2x32xf32, #tpu.memory_space<vmem>>, %arg3: memref<2x32xf32, #tpu.memory_space<vmem>>, %arg4: memref<2x32xf32, #tpu.memory_space<vmem>>) attributes {dimension_semantics = [], scalar_prefetch = 0 : i64, scratch_operands = 0 : i64, tpu.core_type = #tpu.core_type<tc>} {
    %c0 = arith.constant 0 : index
    %c0_0 = arith.constant 0 : index
    %0 = vector.load %arg1[%c0, %c0_0] : memref<32x128xf32, #tpu.memory_space<vmem>>, vector<32x128xf32>
    %cst = arith.constant 0.000000e+00 : f32
    %1 = vector.broadcast %cst : f32 to vector<2x32xf32>
    %c0_i32 = arith.constant 0 : i32
    %cst_1 = arith.constant dense<0.000000e+00> : vector<2x128xf32>
    %2 = tpu.matmul %1, %0, %cst_1 {dimension_numbers = #tpu.dot_dimension_numbers<[1], [0], [0], [1], [0, 0, 1, 1], [], []>} : vector<2x32xf32>, vector<32x128xf32>, vector<2x128xf32> -> vector<2x128xf32>
    %3 = arith.index_cast %c0_i32 : i32 to index
    %c0_2 = arith.constant 0 : index
    %c0_3 = arith.constant 0 : index
    %4 = vector.load %arg0[%3, %c0_2, %c0_3] : memref<24x2x128xf32, #tpu.memory_space<vmem>>, vector<1x2x128xf32>
    %5 = vector.shape_cast %4 : vector<1x2x128xf32> to vector<2x128xf32>
    %6 = arith.addf %5, %2 : vector<2x128xf32>
    %7 = vector.extract_strided_slice %6 {offsets = [0, 0], sizes = [2, 32], strides = [1, 1]} : vector<2x128xf32> to vector<2x32xf32>
    %8 = arith.negf %7 : vector<2x32xf32>
    %9 = math.exp %8 : vector<2x32xf32>
    %cst_4 = arith.constant 1.000000e+00 : f32
    %10 = vector.broadcast %cst_4 : f32 to vector<2x32xf32>
    %11 = arith.addf %10, %9 : vector<2x32xf32>
    %12 = arith.divf %10, %11 : vector<2x32xf32>
    %13 = vector.extract_strided_slice %6 {offsets = [0, 32], sizes = [2, 32], strides = [1, 1]} : vector<2x128xf32> to vector<2x32xf32>
    %14 = arith.negf %13 : vector<2x32xf32>
    %15 = math.exp %14 : vector<2x32xf32>
    %cst_5 = arith.constant 1.000000e+00 : f32
    %16 = vector.broadcast %cst_5 : f32 to vector<2x32xf32>
    %17 = arith.addf %16, %15 : vector<2x32xf32>
    %18 = arith.divf %16, %17 : vector<2x32xf32>
    %19 = vector.extract_strided_slice %6 {offsets = [0, 64], sizes = [2, 32], strides = [1, 1]} : vector<2x128xf32> to vector<2x32xf32>
    %20 = math.tanh %19 : vector<2x32xf32>
    %21 = vector.extract_strided_slice %6 {offsets = [0, 96], sizes = [2, 32], strides = [1, 1]} : vector<2x128xf32> to vector<2x32xf32>
    %22 = arith.negf %21 : vector<2x32xf32>
    %23 = math.exp %22 : vector<2x32xf32>
    %cst_6 = arith.constant 1.000000e+00 : f32
    %24 = vector.broadcast %cst_6 : f32 to vector<2x32xf32>
    %25 = arith.addf %24, %23 : vector<2x32xf32>
    %26 = arith.divf %24, %25 : vector<2x32xf32>
    %27 = arith.mulf %18, %1 : vector<2x32xf32>
    %28 = arith.mulf %12, %20 : vector<2x32xf32>
    %29 = arith.addf %27, %28 : vector<2x32xf32>
    %30 = math.tanh %29 : vector<2x32xf32>
    %31 = arith.mulf %26, %30 : vector<2x32xf32>
    %32 = arith.index_cast %c0_i32 : i32 to index
    %c0_7 = arith.constant 0 : index
    %c0_8 = arith.constant 0 : index
    %33 = vector.load %arg2[%32, %c0_7, %c0_8] : memref<24x2x32xf32, #tpu.memory_space<vmem>>, vector<1x2x32xf32>
    %34 = vector.shape_cast %33 : vector<1x2x32xf32> to vector<2x32xf32>
    %35 = vector.shape_cast %31 : vector<2x32xf32> to vector<1x2x32xf32>
    tpu.vector_store %arg2[%32, %c0_7, %c0_8], %35 {strides = array<i32>} : memref<24x2x32xf32, #tpu.memory_space<vmem>>, vector<1x2x32xf32>,
    %c1_i32 = arith.constant 1 : i32
    %cst_9 = arith.constant dense<0.000000e+00> : vector<2x128xf32>
    %36 = tpu.matmul %31, %0, %cst_9 {dimension_numbers = #tpu.dot_dimension_numbers<[1], [0], [0], [1], [0, 0, 1, 1], [], []>} : vector<2x32xf32>, vector<32x128xf32>, vector<2x128xf32> -> vector<2x128xf32>
    %37 = arith.index_cast %c1_i32 : i32 to index
    %c0_10 = arith.constant 0 : index
    %c0_11 = arith.constant 0 : index
    %38 = vector.load %arg0[%37, %c0_10, %c0_11] : memref<24x2x128xf32, #tpu.memory_space<vmem>>, vector<1x2x128xf32>
    %39 = vector.shape_cast %38 : vector<1x2x128xf32> to vector<2x128xf32>
    %40 = arith.addf %39, %36 : vector<2x128xf32>
    %41 = vector.extract_strided_slice %40 {offsets = [0, 0], sizes = [2, 32], strides = [1, 1]} : vector<2x128xf32> to vector<2x32xf32>
    %42 = arith.negf %41 : vector<2x32xf32>
    %43 = math.exp %42 : vector<2x32xf32>
    %cst_12 = arith.constant 1.000000e+00 : f32
    %44 = vector.broadcast %cst_12 : f32 to vector<2x32xf32>
    %45 = arith.addf %44, %43 : vector<2x32xf32>
    %46 = arith.divf %44, %45 : vector<2x32xf32>
    %47 = vector.extract_strided_slice %40 {offsets = [0, 32], sizes = [2, 32], strides = [1, 1]} : vector<2x128xf32> to vector<2x32xf32>
    %48 = arith.negf %47 : vector<2x32xf32>
    %49 = math.exp %48 : vector<2x32xf32>
    %cst_13 = arith.constant 1.000000e+00 : f32
    %50 = vector.broadcast %cst_13 : f32 to vector<2x32xf32>
    %51 = arith.addf %50, %49 : vector<2x32xf32>
    %52 = arith.divf %50, %51 : vector<2x32xf32>
    %53 = vector.extract_strided_slice %40 {offsets = [0, 64], sizes = [2, 32], strides = [1, 1]} : vector<2x128xf32> to vector<2x32xf32>
    %54 = math.tanh %53 : vector<2x32xf32>
    %55 = vector.extract_strided_slice %40 {offsets = [0, 96], sizes = [2, 32], strides = [1, 1]} : vector<2x128xf32> to vector<2x32xf32>
    %56 = arith.negf %55 : vector<2x32xf32>
    %57 = math.exp %56 : vector<2x32xf32>
    %cst_14 = arith.constant 1.000000e+00 : f32
    %58 = vector.broadcast %cst_14 : f32 to vector<2x32xf32>
    %59 = arith.addf %58, %57 : vector<2x32xf32>
    %60 = arith.divf %58, %59 : vector<2x32xf32>
    %61 = arith.mulf %52, %29 : vector<2x32xf32>
    %62 = arith.mulf %46, %54 : vector<2x32xf32>
    %63 = arith.addf %61, %62 : vector<2x32xf32>
    %64 = math.tanh %63 : vector<2x32xf32>
    %65 = arith.mulf %60, %64 : vector<2x32xf32>
    %66 = arith.index_cast %c1_i32 : i32 to index
    %c0_15 = arith.constant 0 : index
    %c0_16 = arith.constant 0 : index
    %67 = vector.load %arg2[%66, %c0_15, %c0_16] : memref<24x2x32xf32, #tpu.memory_space<vmem>>, vector<1x2x32xf32>
    %68 = vector.shape_cast %67 : vector<1x2x32xf32> to vector<2x32xf32>
    %69 = vector.shape_cast %65 : vector<2x32xf32> to vector<1x2x32xf32>
    tpu.vector_store %arg2[%66, %c0_15, %c0_16], %69 {strides = array<i32>} : memref<24x2x32xf32, #tpu.memory_space<vmem>>, vector<1x2x32xf32>,
    %c2_i32 = arith.constant 2 : i32
    %cst_17 = arith.constant dense<0.000000e+00> : vector<2x128xf32>
    %70 = tpu.matmul %65, %0, %cst_17 {dimension_numbers = #tpu.dot_dimension_numbers<[1], [0], [0], [1], [0, 0, 1, 1], [], []>} : vector<2x32xf32>, vector<32x128xf32>, vector<2x128xf32> -> vector<2x128xf32>
    %71 = arith.index_cast %c2_i32 : i32 to index
    %c0_18 = arith.constant 0 : index
    %c0_19 = arith.constant 0 : index
    %72 = vector.load %arg0[%71, %c0_18, %c0_19] : memref<24x2x128xf32, #tpu.memory_space<vmem>>, vector<1x2x128xf32>
    %73 = vector.shape_cast %72 : vector<1x2x128xf32> to vector<2x128xf32>
    %74 = arith.addf %73, %70 : vector<2x128xf32>
    %75 = vector.extract_strided_slice %74 {offsets = [0, 0], sizes = [2, 32], strides = [1, 1]} : vector<2x128xf32> to vector<2x32xf32>
    %76 = arith.negf %75 : vector<2x32xf32>
    %77 = math.exp %76 : vector<2x32xf32>
    %cst_20 = arith.constant 1.000000e+00 : f32
    %78 = vector.broadcast %cst_20 : f32 to vector<2x32xf32>
    %79 = arith.addf %78, %77 : vector<2x32xf32>
    %80 = arith.divf %78, %79 : vector<2x32xf32>
    %81 = vector.extract_strided_slice %74 {offsets = [0, 32], sizes = [2, 32], strides = [1, 1]} : vector<2x128xf32> to vector<2x32xf32>
    %82 = arith.negf %81 : vector<2x32xf32>
    %83 = math.exp %82 : vector<2x32xf32>
    %cst_21 = arith.constant 1.000000e+00 : f32
    %84 = vector.broadcast %cst_21 : f32 to vector<2x32xf32>
    %85 = arith.addf %84, %83 : vector<2x32xf32>
    %86 = arith.divf %84, %85 : vector<2x32xf32>
    %87 = vector.extract_strided_slice %74 {offsets = [0, 64], sizes = [2, 32], strides = [1, 1]} : vector<2x128xf32> to vector<2x32xf32>
    %88 = math.tanh %87 : vector<2x32xf32>
    %89 = vector.extract_strided_slice %74 {offsets = [0, 96], sizes = [2, 32], strides = [1, 1]} : vector<2x128xf32> to vector<2x32xf32>
    %90 = arith.negf %89 : vector<2x32xf32>
    %91 = math.exp %90 : vector<2x32xf32>
    %cst_22 = arith.constant 1.000000e+00 : f32
    %92 = vector.broadcast %cst_22 : f32 to vector<2x32xf32>
    %93 = arith.addf %92, %91 : vector<2x32xf32>
    %94 = arith.divf %92, %93 : vector<2x32xf32>
    %95 = arith.mulf %86, %63 : vector<2x32xf32>
    %96 = arith.mulf %80, %88 : vector<2x32xf32>
    %97 = arith.addf %95, %96 : vector<2x32xf32>
    %98 = math.tanh %97 : vector<2x32xf32>
    %99 = arith.mulf %94, %98 : vector<2x32xf32>
    %100 = arith.index_cast %c2_i32 : i32 to index
    %c0_23 = arith.constant 0 : index
    %c0_24 = arith.constant 0 : index
    %101 = vector.load %arg2[%100, %c0_23, %c0_24] : memref<24x2x32xf32, #tpu.memory_space<vmem>>, vector<1x2x32xf32>
    %102 = vector.shape_cast %101 : vector<1x2x32xf32> to vector<2x32xf32>
    %103 = vector.shape_cast %99 : vector<2x32xf32> to vector<1x2x32xf32>
    tpu.vector_store %arg2[%100, %c0_23, %c0_24], %103 {strides = array<i32>} : memref<24x2x32xf32, #tpu.memory_space<vmem>>, vector<1x2x32xf32>,
    %c3_i32 = arith.constant 3 : i32
    %cst_25 = arith.constant dense<0.000000e+00> : vector<2x128xf32>
    %104 = tpu.matmul %99, %0, %cst_25 {dimension_numbers = #tpu.dot_dimension_numbers<[1], [0], [0], [1], [0, 0, 1, 1], [], []>} : vector<2x32xf32>, vector<32x128xf32>, vector<2x128xf32> -> vector<2x128xf32>
    %105 = arith.index_cast %c3_i32 : i32 to index
    %c0_26 = arith.constant 0 : index
    %c0_27 = arith.constant 0 : index
    %106 = vector.load %arg0[%105, %c0_26, %c0_27] : memref<24x2x128xf32, #tpu.memory_space<vmem>>, vector<1x2x128xf32>
    %107 = vector.shape_cast %106 : vector<1x2x128xf32> to vector<2x128xf32>
    %108 = arith.addf %107, %104 : vector<2x128xf32>
    %109 = vector.extract_strided_slice %108 {offsets = [0, 0], sizes = [2, 32], strides = [1, 1]} : vector<2x128xf32> to vector<2x32xf32>
    %110 = arith.negf %109 : vector<2x32xf32>
    %111 = math.exp %110 : vector<2x32xf32>
    %cst_28 = arith.constant 1.000000e+00 : f32
    %112 = vector.broadcast %cst_28 : f32 to vector<2x32xf32>
    %113 = arith.addf %112, %111 : vector<2x32xf32>
    %114 = arith.divf %112, %113 : vector<2x32xf32>
    %115 = vector.extract_strided_slice %108 {offsets = [0, 32], sizes = [2, 32], strides = [1, 1]} : vector<2x128xf32> to vector<2x32xf32>
    %116 = arith.negf %115 : vector<2x32xf32>
    %117 = math.exp %116 : vector<2x32xf32>
    %cst_29 = arith.constant 1.000000e+00 : f32
    %118 = vector.broadcast %cst_29 : f32 to vector<2x32xf32>
    %119 = arith.addf %118, %117 : vector<2x32xf32>
    %120 = arith.divf %118, %119 : vector<2x32xf32>
    %121 = vector.extract_strided_slice %108 {offsets = [0, 64], sizes = [2, 32], strides = [1, 1]} : vector<2x128xf32> to vector<2x32xf32>
    %122 = math.tanh %121 : vector<2x32xf32>
    %123 = vector.extract_strided_slice %108 {offsets = [0, 96], sizes = [2, 32], strides = [1, 1]} : vector<2x128xf32> to vector<2x32xf32>
    %124 = arith.negf %123 : vector<2x32xf32>
    %125 = math.exp %124 : vector<2x32xf32>
    %cst_30 = arith.constant 1.000000e+00 : f32
    %126 = vector.broadcast %cst_30 : f32 to vector<2x32xf32>
    %127 = arith.addf %126, %125 : vector<2x32xf32>
    %128 = arith.divf %126, %127 : vector<2x32xf32>
    %129 = arith.mulf %120, %97 : vector<2x32xf32>
    %130 = arith.mulf %114, %122 : vector<2x32xf32>
    %131 = arith.addf %129, %130 : vector<2x32xf32>
    %132 = math.tanh %131 : vector<2x32xf32>
    %133 = arith.mulf %128, %132 : vector<2x32xf32>
    %134 = arith.index_cast %c3_i32 : i32 to index
    %c0_31 = arith.constant 0 : index
    %c0_32 = arith.constant 0 : index
    %135 = vector.load %arg2[%134, %c0_31, %c0_32] : memref<24x2x32xf32, #tpu.memory_space<vmem>>, vector<1x2x32xf32>
    %136 = vector.shape_cast %135 : vector<1x2x32xf32> to vector<2x32xf32>
    %137 = vector.shape_cast %133 : vector<2x32xf32> to vector<1x2x32xf32>
    tpu.vector_store %arg2[%134, %c0_31, %c0_32], %137 {strides = array<i32>} : memref<24x2x32xf32, #tpu.memory_space<vmem>>, vector<1x2x32xf32>,
    %c4_i32 = arith.constant 4 : i32
    %cst_33 = arith.constant dense<0.000000e+00> : vector<2x128xf32>
    %138 = tpu.matmul %133, %0, %cst_33 {dimension_numbers = #tpu.dot_dimension_numbers<[1], [0], [0], [1], [0, 0, 1, 1], [], []>} : vector<2x32xf32>, vector<32x128xf32>, vector<2x128xf32> -> vector<2x128xf32>
    %139 = arith.index_cast %c4_i32 : i32 to index
    %c0_34 = arith.constant 0 : index
    %c0_35 = arith.constant 0 : index
    %140 = vector.load %arg0[%139, %c0_34, %c0_35] : memref<24x2x128xf32, #tpu.memory_space<vmem>>, vector<1x2x128xf32>
    %141 = vector.shape_cast %140 : vector<1x2x128xf32> to vector<2x128xf32>
    %142 = arith.addf %141, %138 : vector<2x128xf32>
    %143 = vector.extract_strided_slice %142 {offsets = [0, 0], sizes = [2, 32], strides = [1, 1]} : vector<2x128xf32> to vector<2x32xf32>
    %144 = arith.negf %143 : vector<2x32xf32>
    %145 = math.exp %144 : vector<2x32xf32>
    %cst_36 = arith.constant 1.000000e+00 : f32
    %146 = vector.broadcast %cst_36 : f32 to vector<2x32xf32>
    %147 = arith.addf %146, %145 : vector<2x32xf32>
    %148 = arith.divf %146, %147 : vector<2x32xf32>
    %149 = vector.extract_strided_slice %142 {offsets = [0, 32], sizes = [2, 32], strides = [1, 1]} : vector<2x128xf32> to vector<2x32xf32>
    %150 = arith.negf %149 : vector<2x32xf32>
    %151 = math.exp %150 : vector<2x32xf32>
    %cst_37 = arith.constant 1.000000e+00 : f32
    %152 = vector.broadcast %cst_37 : f32 to vector<2x32xf32>
    %153 = arith.addf %152, %151 : vector<2x32xf32>
    %154 = arith.divf %152, %153 : vector<2x32xf32>
    %155 = vector.extract_strided_slice %142 {offsets = [0, 64], sizes = [2, 32], strides = [1, 1]} : vector<2x128xf32> to vector<2x32xf32>
    %156 = math.tanh %155 : vector<2x32xf32>
    %157 = vector.extract_strided_slice %142 {offsets = [0, 96], sizes = [2, 32], strides = [1, 1]} : vector<2x128xf32> to vector<2x32xf32>
    %158 = arith.negf %157 : vector<2x32xf32>
    %159 = math.exp %158 : vector<2x32xf32>
    %cst_38 = arith.constant 1.000000e+00 : f32
    %160 = vector.broadcast %cst_38 : f32 to vector<2x32xf32>
    %161 = arith.addf %160, %159 : vector<2x32xf32>
    %162 = arith.divf %160, %161 : vector<2x32xf32>
    %163 = arith.mulf %154, %131 : vector<2x32xf32>
    %164 = arith.mulf %148, %156 : vector<2x32xf32>
    %165 = arith.addf %163, %164 : vector<2x32xf32>
    %166 = math.tanh %165 : vector<2x32xf32>
    %167 = arith.mulf %162, %166 : vector<2x32xf32>
    %168 = arith.index_cast %c4_i32 : i32 to index
    %c0_39 = arith.constant 0 : index
    %c0_40 = arith.constant 0 : index
    %169 = vector.load %arg2[%168, %c0_39, %c0_40] : memref<24x2x32xf32, #tpu.memory_space<vmem>>, vector<1x2x32xf32>
    %170 = vector.shape_cast %169 : vector<1x2x32xf32> to vector<2x32xf32>
    %171 = vector.shape_cast %167 : vector<2x32xf32> to vector<1x2x32xf32>
    tpu.vector_store %arg2[%168, %c0_39, %c0_40], %171 {strides = array<i32>} : memref<24x2x32xf32, #tpu.memory_space<vmem>>, vector<1x2x32xf32>,
    %c5_i32 = arith.constant 5 : i32
    %cst_41 = arith.constant dense<0.000000e+00> : vector<2x128xf32>
    %172 = tpu.matmul %167, %0, %cst_41 {dimension_numbers = #tpu.dot_dimension_numbers<[1], [0], [0], [1], [0, 0, 1, 1], [], []>} : vector<2x32xf32>, vector<32x128xf32>, vector<2x128xf32> -> vector<2x128xf32>
    %173 = arith.index_cast %c5_i32 : i32 to index
    %c0_42 = arith.constant 0 : index
    %c0_43 = arith.constant 0 : index
    %174 = vector.load %arg0[%173, %c0_42, %c0_43] : memref<24x2x128xf32, #tpu.memory_space<vmem>>, vector<1x2x128xf32>
    %175 = vector.shape_cast %174 : vector<1x2x128xf32> to vector<2x128xf32>
    %176 = arith.addf %175, %172 : vector<2x128xf32>
    %177 = vector.extract_strided_slice %176 {offsets = [0, 0], sizes = [2, 32], strides = [1, 1]} : vector<2x128xf32> to vector<2x32xf32>
    %178 = arith.negf %177 : vector<2x32xf32>
    %179 = math.exp %178 : vector<2x32xf32>
    %cst_44 = arith.constant 1.000000e+00 : f32
    %180 = vector.broadcast %cst_44 : f32 to vector<2x32xf32>
    %181 = arith.addf %180, %179 : vector<2x32xf32>
    %182 = arith.divf %180, %181 : vector<2x32xf32>
    %183 = vector.extract_strided_slice %176 {offsets = [0, 32], sizes = [2, 32], strides = [1, 1]} : vector<2x128xf32> to vector<2x32xf32>
    %184 = arith.negf %183 : vector<2x32xf32>
    %185 = math.exp %184 : vector<2x32xf32>
    %cst_45 = arith.constant 1.000000e+00 : f32
    %186 = vector.broadcast %cst_45 : f32 to vector<2x32xf32>
    %187 = arith.addf %186, %185 : vector<2x32xf32>
    %188 = arith.divf %186, %187 : vector<2x32xf32>
    %189 = vector.extract_strided_slice %176 {offsets = [0, 64], sizes = [2, 32], strides = [1, 1]} : vector<2x128xf32> to vector<2x32xf32>
    %190 = math.tanh %189 : vector<2x32xf32>
    %191 = vector.extract_strided_slice %176 {offsets = [0, 96], sizes = [2, 32], strides = [1, 1]} : vector<2x128xf32> to vector<2x32xf32>
    %192 = arith.negf %191 : vector<2x32xf32>
    %193 = math.exp %192 : vector<2x32xf32>
    %cst_46 = arith.constant 1.000000e+00 : f32
    %194 = vector.broadcast %cst_46 : f32 to vector<2x32xf32>
    %195 = arith.addf %194, %193 : vector<2x32xf32>
    %196 = arith.divf %194, %195 : vector<2x32xf32>
    %197 = arith.mulf %188, %165 : vector<2x32xf32>
    %198 = arith.mulf %182, %190 : vector<2x32xf32>
    %199 = arith.addf %197, %198 : vector<2x32xf32>
    %200 = math.tanh %199 : vector<2x32xf32>
    %201 = arith.mulf %196, %200 : vector<2x32xf32>
    %202 = arith.index_cast %c5_i32 : i32 to index
    %c0_47 = arith.constant 0 : index
    %c0_48 = arith.constant 0 : index
    %203 = vector.load %arg2[%202, %c0_47, %c0_48] : memref<24x2x32xf32, #tpu.memory_space<vmem>>, vector<1x2x32xf32>
    %204 = vector.shape_cast %203 : vector<1x2x32xf32> to vector<2x32xf32>
    %205 = vector.shape_cast %201 : vector<2x32xf32> to vector<1x2x32xf32>
    tpu.vector_store %arg2[%202, %c0_47, %c0_48], %205 {strides = array<i32>} : memref<24x2x32xf32, #tpu.memory_space<vmem>>, vector<1x2x32xf32>,
    %c6_i32 = arith.constant 6 : i32
    %cst_49 = arith.constant dense<0.000000e+00> : vector<2x128xf32>
    %206 = tpu.matmul %201, %0, %cst_49 {dimension_numbers = #tpu.dot_dimension_numbers<[1], [0], [0], [1], [0, 0, 1, 1], [], []>} : vector<2x32xf32>, vector<32x128xf32>, vector<2x128xf32> -> vector<2x128xf32>
    %207 = arith.index_cast %c6_i32 : i32 to index
    %c0_50 = arith.constant 0 : index
    %c0_51 = arith.constant 0 : index
    %208 = vector.load %arg0[%207, %c0_50, %c0_51] : memref<24x2x128xf32, #tpu.memory_space<vmem>>, vector<1x2x128xf32>
    %209 = vector.shape_cast %208 : vector<1x2x128xf32> to vector<2x128xf32>
    %210 = arith.addf %209, %206 : vector<2x128xf32>
    %211 = vector.extract_strided_slice %210 {offsets = [0, 0], sizes = [2, 32], strides = [1, 1]} : vector<2x128xf32> to vector<2x32xf32>
    %212 = arith.negf %211 : vector<2x32xf32>
    %213 = math.exp %212 : vector<2x32xf32>
    %cst_52 = arith.constant 1.000000e+00 : f32
    %214 = vector.broadcast %cst_52 : f32 to vector<2x32xf32>
    %215 = arith.addf %214, %213 : vector<2x32xf32>
    %216 = arith.divf %214, %215 : vector<2x32xf32>
    %217 = vector.extract_strided_slice %210 {offsets = [0, 32], sizes = [2, 32], strides = [1, 1]} : vector<2x128xf32> to vector<2x32xf32>
    %218 = arith.negf %217 : vector<2x32xf32>
    %219 = math.exp %218 : vector<2x32xf32>
    %cst_53 = arith.constant 1.000000e+00 : f32
    %220 = vector.broadcast %cst_53 : f32 to vector<2x32xf32>
    %221 = arith.addf %220, %219 : vector<2x32xf32>
    %222 = arith.divf %220, %221 : vector<2x32xf32>
    %223 = vector.extract_strided_slice %210 {offsets = [0, 64], sizes = [2, 32], strides = [1, 1]} : vector<2x128xf32> to vector<2x32xf32>
    %224 = math.tanh %223 : vector<2x32xf32>
    %225 = vector.extract_strided_slice %210 {offsets = [0, 96], sizes = [2, 32], strides = [1, 1]} : vector<2x128xf32> to vector<2x32xf32>
    %226 = arith.negf %225 : vector<2x32xf32>
    %227 = math.exp %226 : vector<2x32xf32>
    %cst_54 = arith.constant 1.000000e+00 : f32
    %228 = vector.broadcast %cst_54 : f32 to vector<2x32xf32>
    %229 = arith.addf %228, %227 : vector<2x32xf32>
    %230 = arith.divf %228, %229 : vector<2x32xf32>
    %231 = arith.mulf %222, %199 : vector<2x32xf32>
    %232 = arith.mulf %216, %224 : vector<2x32xf32>
    %233 = arith.addf %231, %232 : vector<2x32xf32>
    %234 = math.tanh %233 : vector<2x32xf32>
    %235 = arith.mulf %230, %234 : vector<2x32xf32>
    %236 = arith.index_cast %c6_i32 : i32 to index
    %c0_55 = arith.constant 0 : index
    %c0_56 = arith.constant 0 : index
    %237 = vector.load %arg2[%236, %c0_55, %c0_56] : memref<24x2x32xf32, #tpu.memory_space<vmem>>, vector<1x2x32xf32>
    %238 = vector.shape_cast %237 : vector<1x2x32xf32> to vector<2x32xf32>
    %239 = vector.shape_cast %235 : vector<2x32xf32> to vector<1x2x32xf32>
    tpu.vector_store %arg2[%236, %c0_55, %c0_56], %239 {strides = array<i32>} : memref<24x2x32xf32, #tpu.memory_space<vmem>>, vector<1x2x32xf32>,
    %c7_i32 = arith.constant 7 : i32
    %cst_57 = arith.constant dense<0.000000e+00> : vector<2x128xf32>
    %240 = tpu.matmul %235, %0, %cst_57 {dimension_numbers = #tpu.dot_dimension_numbers<[1], [0], [0], [1], [0, 0, 1, 1], [], []>} : vector<2x32xf32>, vector<32x128xf32>, vector<2x128xf32> -> vector<2x128xf32>
    %241 = arith.index_cast %c7_i32 : i32 to index
    %c0_58 = arith.constant 0 : index
    %c0_59 = arith.constant 0 : index
    %242 = vector.load %arg0[%241, %c0_58, %c0_59] : memref<24x2x128xf32, #tpu.memory_space<vmem>>, vector<1x2x128xf32>
    %243 = vector.shape_cast %242 : vector<1x2x128xf32> to vector<2x128xf32>
    %244 = arith.addf %243, %240 : vector<2x128xf32>
    %245 = vector.extract_strided_slice %244 {offsets = [0, 0], sizes = [2, 32], strides = [1, 1]} : vector<2x128xf32> to vector<2x32xf32>
    %246 = arith.negf %245 : vector<2x32xf32>
    %247 = math.exp %246 : vector<2x32xf32>
    %cst_60 = arith.constant 1.000000e+00 : f32
    %248 = vector.broadcast %cst_60 : f32 to vector<2x32xf32>
    %249 = arith.addf %248, %247 : vector<2x32xf32>
    %250 = arith.divf %248, %249 : vector<2x32xf32>
    %251 = vector.extract_strided_slice %244 {offsets = [0, 32], sizes = [2, 32], strides = [1, 1]} : vector<2x128xf32> to vector<2x32xf32>
    %252 = arith.negf %251 : vector<2x32xf32>
    %253 = math.exp %252 : vector<2x32xf32>
    %cst_61 = arith.constant 1.000000e+00 : f32
    %254 = vector.broadcast %cst_61 : f32 to vector<2x32xf32>
    %255 = arith.addf %254, %253 : vector<2x32xf32>
    %256 = arith.divf %254, %255 : vector<2x32xf32>
    %257 = vector.extract_strided_slice %244 {offsets = [0, 64], sizes = [2, 32], strides = [1, 1]} : vector<2x128xf32> to vector<2x32xf32>
    %258 = math.tanh %257 : vector<2x32xf32>
    %259 = vector.extract_strided_slice %244 {offsets = [0, 96], sizes = [2, 32], strides = [1, 1]} : vector<2x128xf32> to vector<2x32xf32>
    %260 = arith.negf %259 : vector<2x32xf32>
    %261 = math.exp %260 : vector<2x32xf32>
    %cst_62 = arith.constant 1.000000e+00 : f32
    %262 = vector.broadcast %cst_62 : f32 to vector<2x32xf32>
    %263 = arith.addf %262, %261 : vector<2x32xf32>
    %264 = arith.divf %262, %263 : vector<2x32xf32>
    %265 = arith.mulf %256, %233 : vector<2x32xf32>
    %266 = arith.mulf %250, %258 : vector<2x32xf32>
    %267 = arith.addf %265, %266 : vector<2x32xf32>
    %268 = math.tanh %267 : vector<2x32xf32>
    %269 = arith.mulf %264, %268 : vector<2x32xf32>
    %270 = arith.index_cast %c7_i32 : i32 to index
    %c0_63 = arith.constant 0 : index
    %c0_64 = arith.constant 0 : index
    %271 = vector.load %arg2[%270, %c0_63, %c0_64] : memref<24x2x32xf32, #tpu.memory_space<vmem>>, vector<1x2x32xf32>
    %272 = vector.shape_cast %271 : vector<1x2x32xf32> to vector<2x32xf32>
    %273 = vector.shape_cast %269 : vector<2x32xf32> to vector<1x2x32xf32>
    tpu.vector_store %arg2[%270, %c0_63, %c0_64], %273 {strides = array<i32>} : memref<24x2x32xf32, #tpu.memory_space<vmem>>, vector<1x2x32xf32>,
    %c8_i32 = arith.constant 8 : i32
    %cst_65 = arith.constant dense<0.000000e+00> : vector<2x128xf32>
    %274 = tpu.matmul %269, %0, %cst_65 {dimension_numbers = #tpu.dot_dimension_numbers<[1], [0], [0], [1], [0, 0, 1, 1], [], []>} : vector<2x32xf32>, vector<32x128xf32>, vector<2x128xf32> -> vector<2x128xf32>
    %275 = arith.index_cast %c8_i32 : i32 to index
    %c0_66 = arith.constant 0 : index
    %c0_67 = arith.constant 0 : index
    %276 = vector.load %arg0[%275, %c0_66, %c0_67] : memref<24x2x128xf32, #tpu.memory_space<vmem>>, vector<1x2x128xf32>
    %277 = vector.shape_cast %276 : vector<1x2x128xf32> to vector<2x128xf32>
    %278 = arith.addf %277, %274 : vector<2x128xf32>
    %279 = vector.extract_strided_slice %278 {offsets = [0, 0], sizes = [2, 32], strides = [1, 1]} : vector<2x128xf32> to vector<2x32xf32>
    %280 = arith.negf %279 : vector<2x32xf32>
    %281 = math.exp %280 : vector<2x32xf32>
    %cst_68 = arith.constant 1.000000e+00 : f32
    %282 = vector.broadcast %cst_68 : f32 to vector<2x32xf32>
    %283 = arith.addf %282, %281 : vector<2x32xf32>
    %284 = arith.divf %282, %283 : vector<2x32xf32>
    %285 = vector.extract_strided_slice %278 {offsets = [0, 32], sizes = [2, 32], strides = [1, 1]} : vector<2x128xf32> to vector<2x32xf32>
    %286 = arith.negf %285 : vector<2x32xf32>
    %287 = math.exp %286 : vector<2x32xf32>
    %cst_69 = arith.constant 1.000000e+00 : f32
    %288 = vector.broadcast %cst_69 : f32 to vector<2x32xf32>
    %289 = arith.addf %288, %287 : vector<2x32xf32>
    %290 = arith.divf %288, %289 : vector<2x32xf32>
    %291 = vector.extract_strided_slice %278 {offsets = [0, 64], sizes = [2, 32], strides = [1, 1]} : vector<2x128xf32> to vector<2x32xf32>
    %292 = math.tanh %291 : vector<2x32xf32>
    %293 = vector.extract_strided_slice %278 {offsets = [0, 96], sizes = [2, 32], strides = [1, 1]} : vector<2x128xf32> to vector<2x32xf32>
    %294 = arith.negf %293 : vector<2x32xf32>
    %295 = math.exp %294 : vector<2x32xf32>
    %cst_70 = arith.constant 1.000000e+00 : f32
    %296 = vector.broadcast %cst_70 : f32 to vector<2x32xf32>
    %297 = arith.addf %296, %295 : vector<2x32xf32>
    %298 = arith.divf %296, %297 : vector<2x32xf32>
    %299 = arith.mulf %290, %267 : vector<2x32xf32>
    %300 = arith.mulf %284, %292 : vector<2x32xf32>
    %301 = arith.addf %299, %300 : vector<2x32xf32>
    %302 = math.tanh %301 : vector<2x32xf32>
    %303 = arith.mulf %298, %302 : vector<2x32xf32>
    %304 = arith.index_cast %c8_i32 : i32 to index
    %c0_71 = arith.constant 0 : index
    %c0_72 = arith.constant 0 : index
    %305 = vector.load %arg2[%304, %c0_71, %c0_72] : memref<24x2x32xf32, #tpu.memory_space<vmem>>, vector<1x2x32xf32>
    %306 = vector.shape_cast %305 : vector<1x2x32xf32> to vector<2x32xf32>
    %307 = vector.shape_cast %303 : vector<2x32xf32> to vector<1x2x32xf32>
    tpu.vector_store %arg2[%304, %c0_71, %c0_72], %307 {strides = array<i32>} : memref<24x2x32xf32, #tpu.memory_space<vmem>>, vector<1x2x32xf32>,
    %c9_i32 = arith.constant 9 : i32
    %cst_73 = arith.constant dense<0.000000e+00> : vector<2x128xf32>
    %308 = tpu.matmul %303, %0, %cst_73 {dimension_numbers = #tpu.dot_dimension_numbers<[1], [0], [0], [1], [0, 0, 1, 1], [], []>} : vector<2x32xf32>, vector<32x128xf32>, vector<2x128xf32> -> vector<2x128xf32>
    %309 = arith.index_cast %c9_i32 : i32 to index
    %c0_74 = arith.constant 0 : index
    %c0_75 = arith.constant 0 : index
    %310 = vector.load %arg0[%309, %c0_74, %c0_75] : memref<24x2x128xf32, #tpu.memory_space<vmem>>, vector<1x2x128xf32>
    %311 = vector.shape_cast %310 : vector<1x2x128xf32> to vector<2x128xf32>
    %312 = arith.addf %311, %308 : vector<2x128xf32>
    %313 = vector.extract_strided_slice %312 {offsets = [0, 0], sizes = [2, 32], strides = [1, 1]} : vector<2x128xf32> to vector<2x32xf32>
    %314 = arith.negf %313 : vector<2x32xf32>
    %315 = math.exp %314 : vector<2x32xf32>
    %cst_76 = arith.constant 1.000000e+00 : f32
    %316 = vector.broadcast %cst_76 : f32 to vector<2x32xf32>
    %317 = arith.addf %316, %315 : vector<2x32xf32>
    %318 = arith.divf %316, %317 : vector<2x32xf32>
    %319 = vector.extract_strided_slice %312 {offsets = [0, 32], sizes = [2, 32], strides = [1, 1]} : vector<2x128xf32> to vector<2x32xf32>
    %320 = arith.negf %319 : vector<2x32xf32>
    %321 = math.exp %320 : vector<2x32xf32>
    %cst_77 = arith.constant 1.000000e+00 : f32
    %322 = vector.broadcast %cst_77 : f32 to vector<2x32xf32>
    %323 = arith.addf %322, %321 : vector<2x32xf32>
    %324 = arith.divf %322, %323 : vector<2x32xf32>
    %325 = vector.extract_strided_slice %312 {offsets = [0, 64], sizes = [2, 32], strides = [1, 1]} : vector<2x128xf32> to vector<2x32xf32>
    %326 = math.tanh %325 : vector<2x32xf32>
    %327 = vector.extract_strided_slice %312 {offsets = [0, 96], sizes = [2, 32], strides = [1, 1]} : vector<2x128xf32> to vector<2x32xf32>
    %328 = arith.negf %327 : vector<2x32xf32>
    %329 = math.exp %328 : vector<2x32xf32>
    %cst_78 = arith.constant 1.000000e+00 : f32
    %330 = vector.broadcast %cst_78 : f32 to vector<2x32xf32>
    %331 = arith.addf %330, %329 : vector<2x32xf32>
    %332 = arith.divf %330, %331 : vector<2x32xf32>
    %333 = arith.mulf %324, %301 : vector<2x32xf32>
    %334 = arith.mulf %318, %326 : vector<2x32xf32>
    %335 = arith.addf %333, %334 : vector<2x32xf32>
    %336 = math.tanh %335 : vector<2x32xf32>
    %337 = arith.mulf %332, %336 : vector<2x32xf32>
    %338 = arith.index_cast %c9_i32 : i32 to index
    %c0_79 = arith.constant 0 : index
    %c0_80 = arith.constant 0 : index
    %339 = vector.load %arg2[%338, %c0_79, %c0_80] : memref<24x2x32xf32, #tpu.memory_space<vmem>>, vector<1x2x32xf32>
    %340 = vector.shape_cast %339 : vector<1x2x32xf32> to vector<2x32xf32>
    %341 = vector.shape_cast %337 : vector<2x32xf32> to vector<1x2x32xf32>
    tpu.vector_store %arg2[%338, %c0_79, %c0_80], %341 {strides = array<i32>} : memref<24x2x32xf32, #tpu.memory_space<vmem>>, vector<1x2x32xf32>,
    %c10_i32 = arith.constant 10 : i32
    %cst_81 = arith.constant dense<0.000000e+00> : vector<2x128xf32>
    %342 = tpu.matmul %337, %0, %cst_81 {dimension_numbers = #tpu.dot_dimension_numbers<[1], [0], [0], [1], [0, 0, 1, 1], [], []>} : vector<2x32xf32>, vector<32x128xf32>, vector<2x128xf32> -> vector<2x128xf32>
    %343 = arith.index_cast %c10_i32 : i32 to index
    %c0_82 = arith.constant 0 : index
    %c0_83 = arith.constant 0 : index
    %344 = vector.load %arg0[%343, %c0_82, %c0_83] : memref<24x2x128xf32, #tpu.memory_space<vmem>>, vector<1x2x128xf32>
    %345 = vector.shape_cast %344 : vector<1x2x128xf32> to vector<2x128xf32>
    %346 = arith.addf %345, %342 : vector<2x128xf32>
    %347 = vector.extract_strided_slice %346 {offsets = [0, 0], sizes = [2, 32], strides = [1, 1]} : vector<2x128xf32> to vector<2x32xf32>
    %348 = arith.negf %347 : vector<2x32xf32>
    %349 = math.exp %348 : vector<2x32xf32>
    %cst_84 = arith.constant 1.000000e+00 : f32
    %350 = vector.broadcast %cst_84 : f32 to vector<2x32xf32>
    %351 = arith.addf %350, %349 : vector<2x32xf32>
    %352 = arith.divf %350, %351 : vector<2x32xf32>
    %353 = vector.extract_strided_slice %346 {offsets = [0, 32], sizes = [2, 32], strides = [1, 1]} : vector<2x128xf32> to vector<2x32xf32>
    %354 = arith.negf %353 : vector<2x32xf32>
    %355 = math.exp %354 : vector<2x32xf32>
    %cst_85 = arith.constant 1.000000e+00 : f32
    %356 = vector.broadcast %cst_85 : f32 to vector<2x32xf32>
    %357 = arith.addf %356, %355 : vector<2x32xf32>
    %358 = arith.divf %356, %357 : vector<2x32xf32>
    %359 = vector.extract_strided_slice %346 {offsets = [0, 64], sizes = [2, 32], strides = [1, 1]} : vector<2x128xf32> to vector<2x32xf32>
    %360 = math.tanh %359 : vector<2x32xf32>
    %361 = vector.extract_strided_slice %346 {offsets = [0, 96], sizes = [2, 32], strides = [1, 1]} : vector<2x128xf32> to vector<2x32xf32>
    %362 = arith.negf %361 : vector<2x32xf32>
    %363 = math.exp %362 : vector<2x32xf32>
    %cst_86 = arith.constant 1.000000e+00 : f32
    %364 = vector.broadcast %cst_86 : f32 to vector<2x32xf32>
    %365 = arith.addf %364, %363 : vector<2x32xf32>
    %366 = arith.divf %364, %365 : vector<2x32xf32>
    %367 = arith.mulf %358, %335 : vector<2x32xf32>
    %368 = arith.mulf %352, %360 : vector<2x32xf32>
    %369 = arith.addf %367, %368 : vector<2x32xf32>
    %370 = math.tanh %369 : vector<2x32xf32>
    %371 = arith.mulf %366, %370 : vector<2x32xf32>
    %372 = arith.index_cast %c10_i32 : i32 to index
    %c0_87 = arith.constant 0 : index
    %c0_88 = arith.constant 0 : index
    %373 = vector.load %arg2[%372, %c0_87, %c0_88] : memref<24x2x32xf32, #tpu.memory_space<vmem>>, vector<1x2x32xf32>
    %374 = vector.shape_cast %373 : vector<1x2x32xf32> to vector<2x32xf32>
    %375 = vector.shape_cast %371 : vector<2x32xf32> to vector<1x2x32xf32>
    tpu.vector_store %arg2[%372, %c0_87, %c0_88], %375 {strides = array<i32>} : memref<24x2x32xf32, #tpu.memory_space<vmem>>, vector<1x2x32xf32>,
    %c11_i32 = arith.constant 11 : i32
    %cst_89 = arith.constant dense<0.000000e+00> : vector<2x128xf32>
    %376 = tpu.matmul %371, %0, %cst_89 {dimension_numbers = #tpu.dot_dimension_numbers<[1], [0], [0], [1], [0, 0, 1, 1], [], []>} : vector<2x32xf32>, vector<32x128xf32>, vector<2x128xf32> -> vector<2x128xf32>
    %377 = arith.index_cast %c11_i32 : i32 to index
    %c0_90 = arith.constant 0 : index
    %c0_91 = arith.constant 0 : index
    %378 = vector.load %arg0[%377, %c0_90, %c0_91] : memref<24x2x128xf32, #tpu.memory_space<vmem>>, vector<1x2x128xf32>
    %379 = vector.shape_cast %378 : vector<1x2x128xf32> to vector<2x128xf32>
    %380 = arith.addf %379, %376 : vector<2x128xf32>
    %381 = vector.extract_strided_slice %380 {offsets = [0, 0], sizes = [2, 32], strides = [1, 1]} : vector<2x128xf32> to vector<2x32xf32>
    %382 = arith.negf %381 : vector<2x32xf32>
    %383 = math.exp %382 : vector<2x32xf32>
    %cst_92 = arith.constant 1.000000e+00 : f32
    %384 = vector.broadcast %cst_92 : f32 to vector<2x32xf32>
    %385 = arith.addf %384, %383 : vector<2x32xf32>
    %386 = arith.divf %384, %385 : vector<2x32xf32>
    %387 = vector.extract_strided_slice %380 {offsets = [0, 32], sizes = [2, 32], strides = [1, 1]} : vector<2x128xf32> to vector<2x32xf32>
    %388 = arith.negf %387 : vector<2x32xf32>
    %389 = math.exp %388 : vector<2x32xf32>
    %cst_93 = arith.constant 1.000000e+00 : f32
    %390 = vector.broadcast %cst_93 : f32 to vector<2x32xf32>
    %391 = arith.addf %390, %389 : vector<2x32xf32>
    %392 = arith.divf %390, %391 : vector<2x32xf32>
    %393 = vector.extract_strided_slice %380 {offsets = [0, 64], sizes = [2, 32], strides = [1, 1]} : vector<2x128xf32> to vector<2x32xf32>
    %394 = math.tanh %393 : vector<2x32xf32>
    %395 = vector.extract_strided_slice %380 {offsets = [0, 96], sizes = [2, 32], strides = [1, 1]} : vector<2x128xf32> to vector<2x32xf32>
    %396 = arith.negf %395 : vector<2x32xf32>
    %397 = math.exp %396 : vector<2x32xf32>
    %cst_94 = arith.constant 1.000000e+00 : f32
    %398 = vector.broadcast %cst_94 : f32 to vector<2x32xf32>
    %399 = arith.addf %398, %397 : vector<2x32xf32>
    %400 = arith.divf %398, %399 : vector<2x32xf32>
    %401 = arith.mulf %392, %369 : vector<2x32xf32>
    %402 = arith.mulf %386, %394 : vector<2x32xf32>
    %403 = arith.addf %401, %402 : vector<2x32xf32>
    %404 = math.tanh %403 : vector<2x32xf32>
    %405 = arith.mulf %400, %404 : vector<2x32xf32>
    %406 = arith.index_cast %c11_i32 : i32 to index
    %c0_95 = arith.constant 0 : index
    %c0_96 = arith.constant 0 : index
    %407 = vector.load %arg2[%406, %c0_95, %c0_96] : memref<24x2x32xf32, #tpu.memory_space<vmem>>, vector<1x2x32xf32>
    %408 = vector.shape_cast %407 : vector<1x2x32xf32> to vector<2x32xf32>
    %409 = vector.shape_cast %405 : vector<2x32xf32> to vector<1x2x32xf32>
    tpu.vector_store %arg2[%406, %c0_95, %c0_96], %409 {strides = array<i32>} : memref<24x2x32xf32, #tpu.memory_space<vmem>>, vector<1x2x32xf32>,
    %c12_i32 = arith.constant 12 : i32
    %cst_97 = arith.constant dense<0.000000e+00> : vector<2x128xf32>
    %410 = tpu.matmul %405, %0, %cst_97 {dimension_numbers = #tpu.dot_dimension_numbers<[1], [0], [0], [1], [0, 0, 1, 1], [], []>} : vector<2x32xf32>, vector<32x128xf32>, vector<2x128xf32> -> vector<2x128xf32>
    %411 = arith.index_cast %c12_i32 : i32 to index
    %c0_98 = arith.constant 0 : index
    %c0_99 = arith.constant 0 : index
    %412 = vector.load %arg0[%411, %c0_98, %c0_99] : memref<24x2x128xf32, #tpu.memory_space<vmem>>, vector<1x2x128xf32>
    %413 = vector.shape_cast %412 : vector<1x2x128xf32> to vector<2x128xf32>
    %414 = arith.addf %413, %410 : vector<2x128xf32>
    %415 = vector.extract_strided_slice %414 {offsets = [0, 0], sizes = [2, 32], strides = [1, 1]} : vector<2x128xf32> to vector<2x32xf32>
    %416 = arith.negf %415 : vector<2x32xf32>
    %417 = math.exp %416 : vector<2x32xf32>
    %cst_100 = arith.constant 1.000000e+00 : f32
    %418 = vector.broadcast %cst_100 : f32 to vector<2x32xf32>
    %419 = arith.addf %418, %417 : vector<2x32xf32>
    %420 = arith.divf %418, %419 : vector<2x32xf32>
    %421 = vector.extract_strided_slice %414 {offsets = [0, 32], sizes = [2, 32], strides = [1, 1]} : vector<2x128xf32> to vector<2x32xf32>
    %422 = arith.negf %421 : vector<2x32xf32>
    %423 = math.exp %422 : vector<2x32xf32>
    %cst_101 = arith.constant 1.000000e+00 : f32
    %424 = vector.broadcast %cst_101 : f32 to vector<2x32xf32>
    %425 = arith.addf %424, %423 : vector<2x32xf32>
    %426 = arith.divf %424, %425 : vector<2x32xf32>
    %427 = vector.extract_strided_slice %414 {offsets = [0, 64], sizes = [2, 32], strides = [1, 1]} : vector<2x128xf32> to vector<2x32xf32>
    %428 = math.tanh %427 : vector<2x32xf32>
    %429 = vector.extract_strided_slice %414 {offsets = [0, 96], sizes = [2, 32], strides = [1, 1]} : vector<2x128xf32> to vector<2x32xf32>
    %430 = arith.negf %429 : vector<2x32xf32>
    %431 = math.exp %430 : vector<2x32xf32>
    %cst_102 = arith.constant 1.000000e+00 : f32
    %432 = vector.broadcast %cst_102 : f32 to vector<2x32xf32>
    %433 = arith.addf %432, %431 : vector<2x32xf32>
    %434 = arith.divf %432, %433 : vector<2x32xf32>
    %435 = arith.mulf %426, %403 : vector<2x32xf32>
    %436 = arith.mulf %420, %428 : vector<2x32xf32>
    %437 = arith.addf %435, %436 : vector<2x32xf32>
    %438 = math.tanh %437 : vector<2x32xf32>
    %439 = arith.mulf %434, %438 : vector<2x32xf32>
    %440 = arith.index_cast %c12_i32 : i32 to index
    %c0_103 = arith.constant 0 : index
    %c0_104 = arith.constant 0 : index
    %441 = vector.load %arg2[%440, %c0_103, %c0_104] : memref<24x2x32xf32, #tpu.memory_space<vmem>>, vector<1x2x32xf32>
    %442 = vector.shape_cast %441 : vector<1x2x32xf32> to vector<2x32xf32>
    %443 = vector.shape_cast %439 : vector<2x32xf32> to vector<1x2x32xf32>
    tpu.vector_store %arg2[%440, %c0_103, %c0_104], %443 {strides = array<i32>} : memref<24x2x32xf32, #tpu.memory_space<vmem>>, vector<1x2x32xf32>,
    %c13_i32 = arith.constant 13 : i32
    %cst_105 = arith.constant dense<0.000000e+00> : vector<2x128xf32>
    %444 = tpu.matmul %439, %0, %cst_105 {dimension_numbers = #tpu.dot_dimension_numbers<[1], [0], [0], [1], [0, 0, 1, 1], [], []>} : vector<2x32xf32>, vector<32x128xf32>, vector<2x128xf32> -> vector<2x128xf32>
    %445 = arith.index_cast %c13_i32 : i32 to index
    %c0_106 = arith.constant 0 : index
    %c0_107 = arith.constant 0 : index
    %446 = vector.load %arg0[%445, %c0_106, %c0_107] : memref<24x2x128xf32, #tpu.memory_space<vmem>>, vector<1x2x128xf32>
    %447 = vector.shape_cast %446 : vector<1x2x128xf32> to vector<2x128xf32>
    %448 = arith.addf %447, %444 : vector<2x128xf32>
    %449 = vector.extract_strided_slice %448 {offsets = [0, 0], sizes = [2, 32], strides = [1, 1]} : vector<2x128xf32> to vector<2x32xf32>
    %450 = arith.negf %449 : vector<2x32xf32>
    %451 = math.exp %450 : vector<2x32xf32>
    %cst_108 = arith.constant 1.000000e+00 : f32
    %452 = vector.broadcast %cst_108 : f32 to vector<2x32xf32>
    %453 = arith.addf %452, %451 : vector<2x32xf32>
    %454 = arith.divf %452, %453 : vector<2x32xf32>
    %455 = vector.extract_strided_slice %448 {offsets = [0, 32], sizes = [2, 32], strides = [1, 1]} : vector<2x128xf32> to vector<2x32xf32>
    %456 = arith.negf %455 : vector<2x32xf32>
    %457 = math.exp %456 : vector<2x32xf32>
    %cst_109 = arith.constant 1.000000e+00 : f32
    %458 = vector.broadcast %cst_109 : f32 to vector<2x32xf32>
    %459 = arith.addf %458, %457 : vector<2x32xf32>
    %460 = arith.divf %458, %459 : vector<2x32xf32>
    %461 = vector.extract_strided_slice %448 {offsets = [0, 64], sizes = [2, 32], strides = [1, 1]} : vector<2x128xf32> to vector<2x32xf32>
    %462 = math.tanh %461 : vector<2x32xf32>
    %463 = vector.extract_strided_slice %448 {offsets = [0, 96], sizes = [2, 32], strides = [1, 1]} : vector<2x128xf32> to vector<2x32xf32>
    %464 = arith.negf %463 : vector<2x32xf32>
    %465 = math.exp %464 : vector<2x32xf32>
    %cst_110 = arith.constant 1.000000e+00 : f32
    %466 = vector.broadcast %cst_110 : f32 to vector<2x32xf32>
    %467 = arith.addf %466, %465 : vector<2x32xf32>
    %468 = arith.divf %466, %467 : vector<2x32xf32>
    %469 = arith.mulf %460, %437 : vector<2x32xf32>
    %470 = arith.mulf %454, %462 : vector<2x32xf32>
    %471 = arith.addf %469, %470 : vector<2x32xf32>
    %472 = math.tanh %471 : vector<2x32xf32>
    %473 = arith.mulf %468, %472 : vector<2x32xf32>
    %474 = arith.index_cast %c13_i32 : i32 to index
    %c0_111 = arith.constant 0 : index
    %c0_112 = arith.constant 0 : index
    %475 = vector.load %arg2[%474, %c0_111, %c0_112] : memref<24x2x32xf32, #tpu.memory_space<vmem>>, vector<1x2x32xf32>
    %476 = vector.shape_cast %475 : vector<1x2x32xf32> to vector<2x32xf32>
    %477 = vector.shape_cast %473 : vector<2x32xf32> to vector<1x2x32xf32>
    tpu.vector_store %arg2[%474, %c0_111, %c0_112], %477 {strides = array<i32>} : memref<24x2x32xf32, #tpu.memory_space<vmem>>, vector<1x2x32xf32>,
    %c14_i32 = arith.constant 14 : i32
    %cst_113 = arith.constant dense<0.000000e+00> : vector<2x128xf32>
    %478 = tpu.matmul %473, %0, %cst_113 {dimension_numbers = #tpu.dot_dimension_numbers<[1], [0], [0], [1], [0, 0, 1, 1], [], []>} : vector<2x32xf32>, vector<32x128xf32>, vector<2x128xf32> -> vector<2x128xf32>
    %479 = arith.index_cast %c14_i32 : i32 to index
    %c0_114 = arith.constant 0 : index
    %c0_115 = arith.constant 0 : index
    %480 = vector.load %arg0[%479, %c0_114, %c0_115] : memref<24x2x128xf32, #tpu.memory_space<vmem>>, vector<1x2x128xf32>
    %481 = vector.shape_cast %480 : vector<1x2x128xf32> to vector<2x128xf32>
    %482 = arith.addf %481, %478 : vector<2x128xf32>
    %483 = vector.extract_strided_slice %482 {offsets = [0, 0], sizes = [2, 32], strides = [1, 1]} : vector<2x128xf32> to vector<2x32xf32>
    %484 = arith.negf %483 : vector<2x32xf32>
    %485 = math.exp %484 : vector<2x32xf32>
    %cst_116 = arith.constant 1.000000e+00 : f32
    %486 = vector.broadcast %cst_116 : f32 to vector<2x32xf32>
    %487 = arith.addf %486, %485 : vector<2x32xf32>
    %488 = arith.divf %486, %487 : vector<2x32xf32>
    %489 = vector.extract_strided_slice %482 {offsets = [0, 32], sizes = [2, 32], strides = [1, 1]} : vector<2x128xf32> to vector<2x32xf32>
    %490 = arith.negf %489 : vector<2x32xf32>
    %491 = math.exp %490 : vector<2x32xf32>
    %cst_117 = arith.constant 1.000000e+00 : f32
    %492 = vector.broadcast %cst_117 : f32 to vector<2x32xf32>
    %493 = arith.addf %492, %491 : vector<2x32xf32>
    %494 = arith.divf %492, %493 : vector<2x32xf32>
    %495 = vector.extract_strided_slice %482 {offsets = [0, 64], sizes = [2, 32], strides = [1, 1]} : vector<2x128xf32> to vector<2x32xf32>
    %496 = math.tanh %495 : vector<2x32xf32>
    %497 = vector.extract_strided_slice %482 {offsets = [0, 96], sizes = [2, 32], strides = [1, 1]} : vector<2x128xf32> to vector<2x32xf32>
    %498 = arith.negf %497 : vector<2x32xf32>
    %499 = math.exp %498 : vector<2x32xf32>
    %cst_118 = arith.constant 1.000000e+00 : f32
    %500 = vector.broadcast %cst_118 : f32 to vector<2x32xf32>
    %501 = arith.addf %500, %499 : vector<2x32xf32>
    %502 = arith.divf %500, %501 : vector<2x32xf32>
    %503 = arith.mulf %494, %471 : vector<2x32xf32>
    %504 = arith.mulf %488, %496 : vector<2x32xf32>
    %505 = arith.addf %503, %504 : vector<2x32xf32>
    %506 = math.tanh %505 : vector<2x32xf32>
    %507 = arith.mulf %502, %506 : vector<2x32xf32>
    %508 = arith.index_cast %c14_i32 : i32 to index
    %c0_119 = arith.constant 0 : index
    %c0_120 = arith.constant 0 : index
    %509 = vector.load %arg2[%508, %c0_119, %c0_120] : memref<24x2x32xf32, #tpu.memory_space<vmem>>, vector<1x2x32xf32>
    %510 = vector.shape_cast %509 : vector<1x2x32xf32> to vector<2x32xf32>
    %511 = vector.shape_cast %507 : vector<2x32xf32> to vector<1x2x32xf32>
    tpu.vector_store %arg2[%508, %c0_119, %c0_120], %511 {strides = array<i32>} : memref<24x2x32xf32, #tpu.memory_space<vmem>>, vector<1x2x32xf32>,
    %c15_i32 = arith.constant 15 : i32
    %cst_121 = arith.constant dense<0.000000e+00> : vector<2x128xf32>
    %512 = tpu.matmul %507, %0, %cst_121 {dimension_numbers = #tpu.dot_dimension_numbers<[1], [0], [0], [1], [0, 0, 1, 1], [], []>} : vector<2x32xf32>, vector<32x128xf32>, vector<2x128xf32> -> vector<2x128xf32>
    %513 = arith.index_cast %c15_i32 : i32 to index
    %c0_122 = arith.constant 0 : index
    %c0_123 = arith.constant 0 : index
    %514 = vector.load %arg0[%513, %c0_122, %c0_123] : memref<24x2x128xf32, #tpu.memory_space<vmem>>, vector<1x2x128xf32>
    %515 = vector.shape_cast %514 : vector<1x2x128xf32> to vector<2x128xf32>
    %516 = arith.addf %515, %512 : vector<2x128xf32>
    %517 = vector.extract_strided_slice %516 {offsets = [0, 0], sizes = [2, 32], strides = [1, 1]} : vector<2x128xf32> to vector<2x32xf32>
    %518 = arith.negf %517 : vector<2x32xf32>
    %519 = math.exp %518 : vector<2x32xf32>
    %cst_124 = arith.constant 1.000000e+00 : f32
    %520 = vector.broadcast %cst_124 : f32 to vector<2x32xf32>
    %521 = arith.addf %520, %519 : vector<2x32xf32>
    %522 = arith.divf %520, %521 : vector<2x32xf32>
    %523 = vector.extract_strided_slice %516 {offsets = [0, 32], sizes = [2, 32], strides = [1, 1]} : vector<2x128xf32> to vector<2x32xf32>
    %524 = arith.negf %523 : vector<2x32xf32>
    %525 = math.exp %524 : vector<2x32xf32>
    %cst_125 = arith.constant 1.000000e+00 : f32
    %526 = vector.broadcast %cst_125 : f32 to vector<2x32xf32>
    %527 = arith.addf %526, %525 : vector<2x32xf32>
    %528 = arith.divf %526, %527 : vector<2x32xf32>
    %529 = vector.extract_strided_slice %516 {offsets = [0, 64], sizes = [2, 32], strides = [1, 1]} : vector<2x128xf32> to vector<2x32xf32>
    %530 = math.tanh %529 : vector<2x32xf32>
    %531 = vector.extract_strided_slice %516 {offsets = [0, 96], sizes = [2, 32], strides = [1, 1]} : vector<2x128xf32> to vector<2x32xf32>
    %532 = arith.negf %531 : vector<2x32xf32>
    %533 = math.exp %532 : vector<2x32xf32>
    %cst_126 = arith.constant 1.000000e+00 : f32
    %534 = vector.broadcast %cst_126 : f32 to vector<2x32xf32>
    %535 = arith.addf %534, %533 : vector<2x32xf32>
    %536 = arith.divf %534, %535 : vector<2x32xf32>
    %537 = arith.mulf %528, %505 : vector<2x32xf32>
    %538 = arith.mulf %522, %530 : vector<2x32xf32>
    %539 = arith.addf %537, %538 : vector<2x32xf32>
    %540 = math.tanh %539 : vector<2x32xf32>
    %541 = arith.mulf %536, %540 : vector<2x32xf32>
    %542 = arith.index_cast %c15_i32 : i32 to index
    %c0_127 = arith.constant 0 : index
    %c0_128 = arith.constant 0 : index
    %543 = vector.load %arg2[%542, %c0_127, %c0_128] : memref<24x2x32xf32, #tpu.memory_space<vmem>>, vector<1x2x32xf32>
    %544 = vector.shape_cast %543 : vector<1x2x32xf32> to vector<2x32xf32>
    %545 = vector.shape_cast %541 : vector<2x32xf32> to vector<1x2x32xf32>
    tpu.vector_store %arg2[%542, %c0_127, %c0_128], %545 {strides = array<i32>} : memref<24x2x32xf32, #tpu.memory_space<vmem>>, vector<1x2x32xf32>,
    %c16_i32 = arith.constant 16 : i32
    %cst_129 = arith.constant dense<0.000000e+00> : vector<2x128xf32>
    %546 = tpu.matmul %541, %0, %cst_129 {dimension_numbers = #tpu.dot_dimension_numbers<[1], [0], [0], [1], [0, 0, 1, 1], [], []>} : vector<2x32xf32>, vector<32x128xf32>, vector<2x128xf32> -> vector<2x128xf32>
    %547 = arith.index_cast %c16_i32 : i32 to index
    %c0_130 = arith.constant 0 : index
    %c0_131 = arith.constant 0 : index
    %548 = vector.load %arg0[%547, %c0_130, %c0_131] : memref<24x2x128xf32, #tpu.memory_space<vmem>>, vector<1x2x128xf32>
    %549 = vector.shape_cast %548 : vector<1x2x128xf32> to vector<2x128xf32>
    %550 = arith.addf %549, %546 : vector<2x128xf32>
    %551 = vector.extract_strided_slice %550 {offsets = [0, 0], sizes = [2, 32], strides = [1, 1]} : vector<2x128xf32> to vector<2x32xf32>
    %552 = arith.negf %551 : vector<2x32xf32>
    %553 = math.exp %552 : vector<2x32xf32>
    %cst_132 = arith.constant 1.000000e+00 : f32
    %554 = vector.broadcast %cst_132 : f32 to vector<2x32xf32>
    %555 = arith.addf %554, %553 : vector<2x32xf32>
    %556 = arith.divf %554, %555 : vector<2x32xf32>
    %557 = vector.extract_strided_slice %550 {offsets = [0, 32], sizes = [2, 32], strides = [1, 1]} : vector<2x128xf32> to vector<2x32xf32>
    %558 = arith.negf %557 : vector<2x32xf32>
    %559 = math.exp %558 : vector<2x32xf32>
    %cst_133 = arith.constant 1.000000e+00 : f32
    %560 = vector.broadcast %cst_133 : f32 to vector<2x32xf32>
    %561 = arith.addf %560, %559 : vector<2x32xf32>
    %562 = arith.divf %560, %561 : vector<2x32xf32>
    %563 = vector.extract_strided_slice %550 {offsets = [0, 64], sizes = [2, 32], strides = [1, 1]} : vector<2x128xf32> to vector<2x32xf32>
    %564 = math.tanh %563 : vector<2x32xf32>
    %565 = vector.extract_strided_slice %550 {offsets = [0, 96], sizes = [2, 32], strides = [1, 1]} : vector<2x128xf32> to vector<2x32xf32>
    %566 = arith.negf %565 : vector<2x32xf32>
    %567 = math.exp %566 : vector<2x32xf32>
    %cst_134 = arith.constant 1.000000e+00 : f32
    %568 = vector.broadcast %cst_134 : f32 to vector<2x32xf32>
    %569 = arith.addf %568, %567 : vector<2x32xf32>
    %570 = arith.divf %568, %569 : vector<2x32xf32>
    %571 = arith.mulf %562, %539 : vector<2x32xf32>
    %572 = arith.mulf %556, %564 : vector<2x32xf32>
    %573 = arith.addf %571, %572 : vector<2x32xf32>
    %574 = math.tanh %573 : vector<2x32xf32>
    %575 = arith.mulf %570, %574 : vector<2x32xf32>
    %576 = arith.index_cast %c16_i32 : i32 to index
    %c0_135 = arith.constant 0 : index
    %c0_136 = arith.constant 0 : index
    %577 = vector.load %arg2[%576, %c0_135, %c0_136] : memref<24x2x32xf32, #tpu.memory_space<vmem>>, vector<1x2x32xf32>
    %578 = vector.shape_cast %577 : vector<1x2x32xf32> to vector<2x32xf32>
    %579 = vector.shape_cast %575 : vector<2x32xf32> to vector<1x2x32xf32>
    tpu.vector_store %arg2[%576, %c0_135, %c0_136], %579 {strides = array<i32>} : memref<24x2x32xf32, #tpu.memory_space<vmem>>, vector<1x2x32xf32>,
    %c17_i32 = arith.constant 17 : i32
    %cst_137 = arith.constant dense<0.000000e+00> : vector<2x128xf32>
    %580 = tpu.matmul %575, %0, %cst_137 {dimension_numbers = #tpu.dot_dimension_numbers<[1], [0], [0], [1], [0, 0, 1, 1], [], []>} : vector<2x32xf32>, vector<32x128xf32>, vector<2x128xf32> -> vector<2x128xf32>
    %581 = arith.index_cast %c17_i32 : i32 to index
    %c0_138 = arith.constant 0 : index
    %c0_139 = arith.constant 0 : index
    %582 = vector.load %arg0[%581, %c0_138, %c0_139] : memref<24x2x128xf32, #tpu.memory_space<vmem>>, vector<1x2x128xf32>
    %583 = vector.shape_cast %582 : vector<1x2x128xf32> to vector<2x128xf32>
    %584 = arith.addf %583, %580 : vector<2x128xf32>
    %585 = vector.extract_strided_slice %584 {offsets = [0, 0], sizes = [2, 32], strides = [1, 1]} : vector<2x128xf32> to vector<2x32xf32>
    %586 = arith.negf %585 : vector<2x32xf32>
    %587 = math.exp %586 : vector<2x32xf32>
    %cst_140 = arith.constant 1.000000e+00 : f32
    %588 = vector.broadcast %cst_140 : f32 to vector<2x32xf32>
    %589 = arith.addf %588, %587 : vector<2x32xf32>
    %590 = arith.divf %588, %589 : vector<2x32xf32>
    %591 = vector.extract_strided_slice %584 {offsets = [0, 32], sizes = [2, 32], strides = [1, 1]} : vector<2x128xf32> to vector<2x32xf32>
    %592 = arith.negf %591 : vector<2x32xf32>
    %593 = math.exp %592 : vector<2x32xf32>
    %cst_141 = arith.constant 1.000000e+00 : f32
    %594 = vector.broadcast %cst_141 : f32 to vector<2x32xf32>
    %595 = arith.addf %594, %593 : vector<2x32xf32>
    %596 = arith.divf %594, %595 : vector<2x32xf32>
    %597 = vector.extract_strided_slice %584 {offsets = [0, 64], sizes = [2, 32], strides = [1, 1]} : vector<2x128xf32> to vector<2x32xf32>
    %598 = math.tanh %597 : vector<2x32xf32>
    %599 = vector.extract_strided_slice %584 {offsets = [0, 96], sizes = [2, 32], strides = [1, 1]} : vector<2x128xf32> to vector<2x32xf32>
    %600 = arith.negf %599 : vector<2x32xf32>
    %601 = math.exp %600 : vector<2x32xf32>
    %cst_142 = arith.constant 1.000000e+00 : f32
    %602 = vector.broadcast %cst_142 : f32 to vector<2x32xf32>
    %603 = arith.addf %602, %601 : vector<2x32xf32>
    %604 = arith.divf %602, %603 : vector<2x32xf32>
    %605 = arith.mulf %596, %573 : vector<2x32xf32>
    %606 = arith.mulf %590, %598 : vector<2x32xf32>
    %607 = arith.addf %605, %606 : vector<2x32xf32>
    %608 = math.tanh %607 : vector<2x32xf32>
    %609 = arith.mulf %604, %608 : vector<2x32xf32>
    %610 = arith.index_cast %c17_i32 : i32 to index
    %c0_143 = arith.constant 0 : index
    %c0_144 = arith.constant 0 : index
    %611 = vector.load %arg2[%610, %c0_143, %c0_144] : memref<24x2x32xf32, #tpu.memory_space<vmem>>, vector<1x2x32xf32>
    %612 = vector.shape_cast %611 : vector<1x2x32xf32> to vector<2x32xf32>
    %613 = vector.shape_cast %609 : vector<2x32xf32> to vector<1x2x32xf32>
    tpu.vector_store %arg2[%610, %c0_143, %c0_144], %613 {strides = array<i32>} : memref<24x2x32xf32, #tpu.memory_space<vmem>>, vector<1x2x32xf32>,
    %c18_i32 = arith.constant 18 : i32
    %cst_145 = arith.constant dense<0.000000e+00> : vector<2x128xf32>
    %614 = tpu.matmul %609, %0, %cst_145 {dimension_numbers = #tpu.dot_dimension_numbers<[1], [0], [0], [1], [0, 0, 1, 1], [], []>} : vector<2x32xf32>, vector<32x128xf32>, vector<2x128xf32> -> vector<2x128xf32>
    %615 = arith.index_cast %c18_i32 : i32 to index
    %c0_146 = arith.constant 0 : index
    %c0_147 = arith.constant 0 : index
    %616 = vector.load %arg0[%615, %c0_146, %c0_147] : memref<24x2x128xf32, #tpu.memory_space<vmem>>, vector<1x2x128xf32>
    %617 = vector.shape_cast %616 : vector<1x2x128xf32> to vector<2x128xf32>
    %618 = arith.addf %617, %614 : vector<2x128xf32>
    %619 = vector.extract_strided_slice %618 {offsets = [0, 0], sizes = [2, 32], strides = [1, 1]} : vector<2x128xf32> to vector<2x32xf32>
    %620 = arith.negf %619 : vector<2x32xf32>
    %621 = math.exp %620 : vector<2x32xf32>
    %cst_148 = arith.constant 1.000000e+00 : f32
    %622 = vector.broadcast %cst_148 : f32 to vector<2x32xf32>
    %623 = arith.addf %622, %621 : vector<2x32xf32>
    %624 = arith.divf %622, %623 : vector<2x32xf32>
    %625 = vector.extract_strided_slice %618 {offsets = [0, 32], sizes = [2, 32], strides = [1, 1]} : vector<2x128xf32> to vector<2x32xf32>
    %626 = arith.negf %625 : vector<2x32xf32>
    %627 = math.exp %626 : vector<2x32xf32>
    %cst_149 = arith.constant 1.000000e+00 : f32
    %628 = vector.broadcast %cst_149 : f32 to vector<2x32xf32>
    %629 = arith.addf %628, %627 : vector<2x32xf32>
    %630 = arith.divf %628, %629 : vector<2x32xf32>
    %631 = vector.extract_strided_slice %618 {offsets = [0, 64], sizes = [2, 32], strides = [1, 1]} : vector<2x128xf32> to vector<2x32xf32>
    %632 = math.tanh %631 : vector<2x32xf32>
    %633 = vector.extract_strided_slice %618 {offsets = [0, 96], sizes = [2, 32], strides = [1, 1]} : vector<2x128xf32> to vector<2x32xf32>
    %634 = arith.negf %633 : vector<2x32xf32>
    %635 = math.exp %634 : vector<2x32xf32>
    %cst_150 = arith.constant 1.000000e+00 : f32
    %636 = vector.broadcast %cst_150 : f32 to vector<2x32xf32>
    %637 = arith.addf %636, %635 : vector<2x32xf32>
    %638 = arith.divf %636, %637 : vector<2x32xf32>
    %639 = arith.mulf %630, %607 : vector<2x32xf32>
    %640 = arith.mulf %624, %632 : vector<2x32xf32>
    %641 = arith.addf %639, %640 : vector<2x32xf32>
    %642 = math.tanh %641 : vector<2x32xf32>
    %643 = arith.mulf %638, %642 : vector<2x32xf32>
    %644 = arith.index_cast %c18_i32 : i32 to index
    %c0_151 = arith.constant 0 : index
    %c0_152 = arith.constant 0 : index
    %645 = vector.load %arg2[%644, %c0_151, %c0_152] : memref<24x2x32xf32, #tpu.memory_space<vmem>>, vector<1x2x32xf32>
    %646 = vector.shape_cast %645 : vector<1x2x32xf32> to vector<2x32xf32>
    %647 = vector.shape_cast %643 : vector<2x32xf32> to vector<1x2x32xf32>
    tpu.vector_store %arg2[%644, %c0_151, %c0_152], %647 {strides = array<i32>} : memref<24x2x32xf32, #tpu.memory_space<vmem>>, vector<1x2x32xf32>,
    %c19_i32 = arith.constant 19 : i32
    %cst_153 = arith.constant dense<0.000000e+00> : vector<2x128xf32>
    %648 = tpu.matmul %643, %0, %cst_153 {dimension_numbers = #tpu.dot_dimension_numbers<[1], [0], [0], [1], [0, 0, 1, 1], [], []>} : vector<2x32xf32>, vector<32x128xf32>, vector<2x128xf32> -> vector<2x128xf32>
    %649 = arith.index_cast %c19_i32 : i32 to index
    %c0_154 = arith.constant 0 : index
    %c0_155 = arith.constant 0 : index
    %650 = vector.load %arg0[%649, %c0_154, %c0_155] : memref<24x2x128xf32, #tpu.memory_space<vmem>>, vector<1x2x128xf32>
    %651 = vector.shape_cast %650 : vector<1x2x128xf32> to vector<2x128xf32>
    %652 = arith.addf %651, %648 : vector<2x128xf32>
    %653 = vector.extract_strided_slice %652 {offsets = [0, 0], sizes = [2, 32], strides = [1, 1]} : vector<2x128xf32> to vector<2x32xf32>
    %654 = arith.negf %653 : vector<2x32xf32>
    %655 = math.exp %654 : vector<2x32xf32>
    %cst_156 = arith.constant 1.000000e+00 : f32
    %656 = vector.broadcast %cst_156 : f32 to vector<2x32xf32>
    %657 = arith.addf %656, %655 : vector<2x32xf32>
    %658 = arith.divf %656, %657 : vector<2x32xf32>
    %659 = vector.extract_strided_slice %652 {offsets = [0, 32], sizes = [2, 32], strides = [1, 1]} : vector<2x128xf32> to vector<2x32xf32>
    %660 = arith.negf %659 : vector<2x32xf32>
    %661 = math.exp %660 : vector<2x32xf32>
    %cst_157 = arith.constant 1.000000e+00 : f32
    %662 = vector.broadcast %cst_157 : f32 to vector<2x32xf32>
    %663 = arith.addf %662, %661 : vector<2x32xf32>
    %664 = arith.divf %662, %663 : vector<2x32xf32>
    %665 = vector.extract_strided_slice %652 {offsets = [0, 64], sizes = [2, 32], strides = [1, 1]} : vector<2x128xf32> to vector<2x32xf32>
    %666 = math.tanh %665 : vector<2x32xf32>
    %667 = vector.extract_strided_slice %652 {offsets = [0, 96], sizes = [2, 32], strides = [1, 1]} : vector<2x128xf32> to vector<2x32xf32>
    %668 = arith.negf %667 : vector<2x32xf32>
    %669 = math.exp %668 : vector<2x32xf32>
    %cst_158 = arith.constant 1.000000e+00 : f32
    %670 = vector.broadcast %cst_158 : f32 to vector<2x32xf32>
    %671 = arith.addf %670, %669 : vector<2x32xf32>
    %672 = arith.divf %670, %671 : vector<2x32xf32>
    %673 = arith.mulf %664, %641 : vector<2x32xf32>
    %674 = arith.mulf %658, %666 : vector<2x32xf32>
    %675 = arith.addf %673, %674 : vector<2x32xf32>
    %676 = math.tanh %675 : vector<2x32xf32>
    %677 = arith.mulf %672, %676 : vector<2x32xf32>
    %678 = arith.index_cast %c19_i32 : i32 to index
    %c0_159 = arith.constant 0 : index
    %c0_160 = arith.constant 0 : index
    %679 = vector.load %arg2[%678, %c0_159, %c0_160] : memref<24x2x32xf32, #tpu.memory_space<vmem>>, vector<1x2x32xf32>
    %680 = vector.shape_cast %679 : vector<1x2x32xf32> to vector<2x32xf32>
    %681 = vector.shape_cast %677 : vector<2x32xf32> to vector<1x2x32xf32>
    tpu.vector_store %arg2[%678, %c0_159, %c0_160], %681 {strides = array<i32>} : memref<24x2x32xf32, #tpu.memory_space<vmem>>, vector<1x2x32xf32>,
    %c20_i32 = arith.constant 20 : i32
    %cst_161 = arith.constant dense<0.000000e+00> : vector<2x128xf32>
    %682 = tpu.matmul %677, %0, %cst_161 {dimension_numbers = #tpu.dot_dimension_numbers<[1], [0], [0], [1], [0, 0, 1, 1], [], []>} : vector<2x32xf32>, vector<32x128xf32>, vector<2x128xf32> -> vector<2x128xf32>
    %683 = arith.index_cast %c20_i32 : i32 to index
    %c0_162 = arith.constant 0 : index
    %c0_163 = arith.constant 0 : index
    %684 = vector.load %arg0[%683, %c0_162, %c0_163] : memref<24x2x128xf32, #tpu.memory_space<vmem>>, vector<1x2x128xf32>
    %685 = vector.shape_cast %684 : vector<1x2x128xf32> to vector<2x128xf32>
    %686 = arith.addf %685, %682 : vector<2x128xf32>
    %687 = vector.extract_strided_slice %686 {offsets = [0, 0], sizes = [2, 32], strides = [1, 1]} : vector<2x128xf32> to vector<2x32xf32>
    %688 = arith.negf %687 : vector<2x32xf32>
    %689 = math.exp %688 : vector<2x32xf32>
    %cst_164 = arith.constant 1.000000e+00 : f32
    %690 = vector.broadcast %cst_164 : f32 to vector<2x32xf32>
    %691 = arith.addf %690, %689 : vector<2x32xf32>
    %692 = arith.divf %690, %691 : vector<2x32xf32>
    %693 = vector.extract_strided_slice %686 {offsets = [0, 32], sizes = [2, 32], strides = [1, 1]} : vector<2x128xf32> to vector<2x32xf32>
    %694 = arith.negf %693 : vector<2x32xf32>
    %695 = math.exp %694 : vector<2x32xf32>
    %cst_165 = arith.constant 1.000000e+00 : f32
    %696 = vector.broadcast %cst_165 : f32 to vector<2x32xf32>
    %697 = arith.addf %696, %695 : vector<2x32xf32>
    %698 = arith.divf %696, %697 : vector<2x32xf32>
    %699 = vector.extract_strided_slice %686 {offsets = [0, 64], sizes = [2, 32], strides = [1, 1]} : vector<2x128xf32> to vector<2x32xf32>
    %700 = math.tanh %699 : vector<2x32xf32>
    %701 = vector.extract_strided_slice %686 {offsets = [0, 96], sizes = [2, 32], strides = [1, 1]} : vector<2x128xf32> to vector<2x32xf32>
    %702 = arith.negf %701 : vector<2x32xf32>
    %703 = math.exp %702 : vector<2x32xf32>
    %cst_166 = arith.constant 1.000000e+00 : f32
    %704 = vector.broadcast %cst_166 : f32 to vector<2x32xf32>
    %705 = arith.addf %704, %703 : vector<2x32xf32>
    %706 = arith.divf %704, %705 : vector<2x32xf32>
    %707 = arith.mulf %698, %675 : vector<2x32xf32>
    %708 = arith.mulf %692, %700 : vector<2x32xf32>
    %709 = arith.addf %707, %708 : vector<2x32xf32>
    %710 = math.tanh %709 : vector<2x32xf32>
    %711 = arith.mulf %706, %710 : vector<2x32xf32>
    %712 = arith.index_cast %c20_i32 : i32 to index
    %c0_167 = arith.constant 0 : index
    %c0_168 = arith.constant 0 : index
    %713 = vector.load %arg2[%712, %c0_167, %c0_168] : memref<24x2x32xf32, #tpu.memory_space<vmem>>, vector<1x2x32xf32>
    %714 = vector.shape_cast %713 : vector<1x2x32xf32> to vector<2x32xf32>
    %715 = vector.shape_cast %711 : vector<2x32xf32> to vector<1x2x32xf32>
    tpu.vector_store %arg2[%712, %c0_167, %c0_168], %715 {strides = array<i32>} : memref<24x2x32xf32, #tpu.memory_space<vmem>>, vector<1x2x32xf32>,
    %c21_i32 = arith.constant 21 : i32
    %cst_169 = arith.constant dense<0.000000e+00> : vector<2x128xf32>
    %716 = tpu.matmul %711, %0, %cst_169 {dimension_numbers = #tpu.dot_dimension_numbers<[1], [0], [0], [1], [0, 0, 1, 1], [], []>} : vector<2x32xf32>, vector<32x128xf32>, vector<2x128xf32> -> vector<2x128xf32>
    %717 = arith.index_cast %c21_i32 : i32 to index
    %c0_170 = arith.constant 0 : index
    %c0_171 = arith.constant 0 : index
    %718 = vector.load %arg0[%717, %c0_170, %c0_171] : memref<24x2x128xf32, #tpu.memory_space<vmem>>, vector<1x2x128xf32>
    %719 = vector.shape_cast %718 : vector<1x2x128xf32> to vector<2x128xf32>
    %720 = arith.addf %719, %716 : vector<2x128xf32>
    %721 = vector.extract_strided_slice %720 {offsets = [0, 0], sizes = [2, 32], strides = [1, 1]} : vector<2x128xf32> to vector<2x32xf32>
    %722 = arith.negf %721 : vector<2x32xf32>
    %723 = math.exp %722 : vector<2x32xf32>
    %cst_172 = arith.constant 1.000000e+00 : f32
    %724 = vector.broadcast %cst_172 : f32 to vector<2x32xf32>
    %725 = arith.addf %724, %723 : vector<2x32xf32>
    %726 = arith.divf %724, %725 : vector<2x32xf32>
    %727 = vector.extract_strided_slice %720 {offsets = [0, 32], sizes = [2, 32], strides = [1, 1]} : vector<2x128xf32> to vector<2x32xf32>
    %728 = arith.negf %727 : vector<2x32xf32>
    %729 = math.exp %728 : vector<2x32xf32>
    %cst_173 = arith.constant 1.000000e+00 : f32
    %730 = vector.broadcast %cst_173 : f32 to vector<2x32xf32>
    %731 = arith.addf %730, %729 : vector<2x32xf32>
    %732 = arith.divf %730, %731 : vector<2x32xf32>
    %733 = vector.extract_strided_slice %720 {offsets = [0, 64], sizes = [2, 32], strides = [1, 1]} : vector<2x128xf32> to vector<2x32xf32>
    %734 = math.tanh %733 : vector<2x32xf32>
    %735 = vector.extract_strided_slice %720 {offsets = [0, 96], sizes = [2, 32], strides = [1, 1]} : vector<2x128xf32> to vector<2x32xf32>
    %736 = arith.negf %735 : vector<2x32xf32>
    %737 = math.exp %736 : vector<2x32xf32>
    %cst_174 = arith.constant 1.000000e+00 : f32
    %738 = vector.broadcast %cst_174 : f32 to vector<2x32xf32>
    %739 = arith.addf %738, %737 : vector<2x32xf32>
    %740 = arith.divf %738, %739 : vector<2x32xf32>
    %741 = arith.mulf %732, %709 : vector<2x32xf32>
    %742 = arith.mulf %726, %734 : vector<2x32xf32>
    %743 = arith.addf %741, %742 : vector<2x32xf32>
    %744 = math.tanh %743 : vector<2x32xf32>
    %745 = arith.mulf %740, %744 : vector<2x32xf32>
    %746 = arith.index_cast %c21_i32 : i32 to index
    %c0_175 = arith.constant 0 : index
    %c0_176 = arith.constant 0 : index
    %747 = vector.load %arg2[%746, %c0_175, %c0_176] : memref<24x2x32xf32, #tpu.memory_space<vmem>>, vector<1x2x32xf32>
    %748 = vector.shape_cast %747 : vector<1x2x32xf32> to vector<2x32xf32>
    %749 = vector.shape_cast %745 : vector<2x32xf32> to vector<1x2x32xf32>
    tpu.vector_store %arg2[%746, %c0_175, %c0_176], %749 {strides = array<i32>} : memref<24x2x32xf32, #tpu.memory_space<vmem>>, vector<1x2x32xf32>,
    %c22_i32 = arith.constant 22 : i32
    %cst_177 = arith.constant dense<0.000000e+00> : vector<2x128xf32>
    %750 = tpu.matmul %745, %0, %cst_177 {dimension_numbers = #tpu.dot_dimension_numbers<[1], [0], [0], [1], [0, 0, 1, 1], [], []>} : vector<2x32xf32>, vector<32x128xf32>, vector<2x128xf32> -> vector<2x128xf32>
    %751 = arith.index_cast %c22_i32 : i32 to index
    %c0_178 = arith.constant 0 : index
    %c0_179 = arith.constant 0 : index
    %752 = vector.load %arg0[%751, %c0_178, %c0_179] : memref<24x2x128xf32, #tpu.memory_space<vmem>>, vector<1x2x128xf32>
    %753 = vector.shape_cast %752 : vector<1x2x128xf32> to vector<2x128xf32>
    %754 = arith.addf %753, %750 : vector<2x128xf32>
    %755 = vector.extract_strided_slice %754 {offsets = [0, 0], sizes = [2, 32], strides = [1, 1]} : vector<2x128xf32> to vector<2x32xf32>
    %756 = arith.negf %755 : vector<2x32xf32>
    %757 = math.exp %756 : vector<2x32xf32>
    %cst_180 = arith.constant 1.000000e+00 : f32
    %758 = vector.broadcast %cst_180 : f32 to vector<2x32xf32>
    %759 = arith.addf %758, %757 : vector<2x32xf32>
    %760 = arith.divf %758, %759 : vector<2x32xf32>
    %761 = vector.extract_strided_slice %754 {offsets = [0, 32], sizes = [2, 32], strides = [1, 1]} : vector<2x128xf32> to vector<2x32xf32>
    %762 = arith.negf %761 : vector<2x32xf32>
    %763 = math.exp %762 : vector<2x32xf32>
    %cst_181 = arith.constant 1.000000e+00 : f32
    %764 = vector.broadcast %cst_181 : f32 to vector<2x32xf32>
    %765 = arith.addf %764, %763 : vector<2x32xf32>
    %766 = arith.divf %764, %765 : vector<2x32xf32>
    %767 = vector.extract_strided_slice %754 {offsets = [0, 64], sizes = [2, 32], strides = [1, 1]} : vector<2x128xf32> to vector<2x32xf32>
    %768 = math.tanh %767 : vector<2x32xf32>
    %769 = vector.extract_strided_slice %754 {offsets = [0, 96], sizes = [2, 32], strides = [1, 1]} : vector<2x128xf32> to vector<2x32xf32>
    %770 = arith.negf %769 : vector<2x32xf32>
    %771 = math.exp %770 : vector<2x32xf32>
    %cst_182 = arith.constant 1.000000e+00 : f32
    %772 = vector.broadcast %cst_182 : f32 to vector<2x32xf32>
    %773 = arith.addf %772, %771 : vector<2x32xf32>
    %774 = arith.divf %772, %773 : vector<2x32xf32>
    %775 = arith.mulf %766, %743 : vector<2x32xf32>
    %776 = arith.mulf %760, %768 : vector<2x32xf32>
    %777 = arith.addf %775, %776 : vector<2x32xf32>
    %778 = math.tanh %777 : vector<2x32xf32>
    %779 = arith.mulf %774, %778 : vector<2x32xf32>
    %780 = arith.index_cast %c22_i32 : i32 to index
    %c0_183 = arith.constant 0 : index
    %c0_184 = arith.constant 0 : index
    %781 = vector.load %arg2[%780, %c0_183, %c0_184] : memref<24x2x32xf32, #tpu.memory_space<vmem>>, vector<1x2x32xf32>
    %782 = vector.shape_cast %781 : vector<1x2x32xf32> to vector<2x32xf32>
    %783 = vector.shape_cast %779 : vector<2x32xf32> to vector<1x2x32xf32>
    tpu.vector_store %arg2[%780, %c0_183, %c0_184], %783 {strides = array<i32>} : memref<24x2x32xf32, #tpu.memory_space<vmem>>, vector<1x2x32xf32>,
    %c23_i32 = arith.constant 23 : i32
    %cst_185 = arith.constant dense<0.000000e+00> : vector<2x128xf32>
    %784 = tpu.matmul %779, %0, %cst_185 {dimension_numbers = #tpu.dot_dimension_numbers<[1], [0], [0], [1], [0, 0, 1, 1], [], []>} : vector<2x32xf32>, vector<32x128xf32>, vector<2x128xf32> -> vector<2x128xf32>
    %785 = arith.index_cast %c23_i32 : i32 to index
    %c0_186 = arith.constant 0 : index
    %c0_187 = arith.constant 0 : index
    %786 = vector.load %arg0[%785, %c0_186, %c0_187] : memref<24x2x128xf32, #tpu.memory_space<vmem>>, vector<1x2x128xf32>
    %787 = vector.shape_cast %786 : vector<1x2x128xf32> to vector<2x128xf32>
    %788 = arith.addf %787, %784 : vector<2x128xf32>
    %789 = vector.extract_strided_slice %788 {offsets = [0, 0], sizes = [2, 32], strides = [1, 1]} : vector<2x128xf32> to vector<2x32xf32>
    %790 = arith.negf %789 : vector<2x32xf32>
    %791 = math.exp %790 : vector<2x32xf32>
    %cst_188 = arith.constant 1.000000e+00 : f32
    %792 = vector.broadcast %cst_188 : f32 to vector<2x32xf32>
    %793 = arith.addf %792, %791 : vector<2x32xf32>
    %794 = arith.divf %792, %793 : vector<2x32xf32>
    %795 = vector.extract_strided_slice %788 {offsets = [0, 32], sizes = [2, 32], strides = [1, 1]} : vector<2x128xf32> to vector<2x32xf32>
    %796 = arith.negf %795 : vector<2x32xf32>
    %797 = math.exp %796 : vector<2x32xf32>
    %cst_189 = arith.constant 1.000000e+00 : f32
    %798 = vector.broadcast %cst_189 : f32 to vector<2x32xf32>
    %799 = arith.addf %798, %797 : vector<2x32xf32>
    %800 = arith.divf %798, %799 : vector<2x32xf32>
    %801 = vector.extract_strided_slice %788 {offsets = [0, 64], sizes = [2, 32], strides = [1, 1]} : vector<2x128xf32> to vector<2x32xf32>
    %802 = math.tanh %801 : vector<2x32xf32>
    %803 = vector.extract_strided_slice %788 {offsets = [0, 96], sizes = [2, 32], strides = [1, 1]} : vector<2x128xf32> to vector<2x32xf32>
    %804 = arith.negf %803 : vector<2x32xf32>
    %805 = math.exp %804 : vector<2x32xf32>
    %cst_190 = arith.constant 1.000000e+00 : f32
    %806 = vector.broadcast %cst_190 : f32 to vector<2x32xf32>
    %807 = arith.addf %806, %805 : vector<2x32xf32>
    %808 = arith.divf %806, %807 : vector<2x32xf32>
    %809 = arith.mulf %800, %777 : vector<2x32xf32>
    %810 = arith.mulf %794, %802 : vector<2x32xf32>
    %811 = arith.addf %809, %810 : vector<2x32xf32>
    %812 = math.tanh %811 : vector<2x32xf32>
    %813 = arith.mulf %808, %812 : vector<2x32xf32>
    %814 = arith.index_cast %c23_i32 : i32 to index
    %c0_191 = arith.constant 0 : index
    %c0_192 = arith.constant 0 : index
    %815 = vector.load %arg2[%814, %c0_191, %c0_192] : memref<24x2x32xf32, #tpu.memory_space<vmem>>, vector<1x2x32xf32>
    %816 = vector.shape_cast %815 : vector<1x2x32xf32> to vector<2x32xf32>
    %817 = vector.shape_cast %813 : vector<2x32xf32> to vector<1x2x32xf32>
    tpu.vector_store %arg2[%814, %c0_191, %c0_192], %817 {strides = array<i32>} : memref<24x2x32xf32, #tpu.memory_space<vmem>>, vector<1x2x32xf32>,
    %c24_i32 = arith.constant 24 : i32
    %c0_193 = arith.constant 0 : index
    %c0_194 = arith.constant 0 : index
    %818 = vector.load %arg3[%c0_193, %c0_194] : memref<2x32xf32, #tpu.memory_space<vmem>>, vector<2x32xf32>
    tpu.vector_store %arg3[%c0_193, %c0_194], %813 {strides = array<i32>} : memref<2x32xf32, #tpu.memory_space<vmem>>, vector<2x32xf32>,
    %c0_195 = arith.constant 0 : index
    %c0_196 = arith.constant 0 : index
    %819 = vector.load %arg4[%c0_195, %c0_196] : memref<2x32xf32, #tpu.memory_space<vmem>>, vector<2x32xf32>
    tpu.vector_store %arg4[%c0_195, %c0_196], %811 {strides = array<i32>} : memref<2x32xf32, #tpu.memory_space<vmem>>, vector<2x32xf32>,
    return
  }
}

</mosaic_0001>

<llo_original>
// kernel: encoder_forward.1
$region0: #{encoder_forward.1}
  #allocation0 [shape = 'u32[]', space=smem, size = 0x4, offset = 0x4, fixed_abs, tag = 'smem constant byte address 0x4 - core index']
  #allocation1 [shape = 'u32[72,128]{1,0:T(1,128)}', space=vmem, size = 0x9000, scoped, tag = 'internal scratch']
  %s0 = inlined_call_operand.vmem [shape: f32[24,2,128], index: 0, kind: input, shape index: {}]
  %s1 = inlined_call_operand.vmem [shape: f32[32,128], index: 1, kind: input, shape index: {}]
  %s2 = inlined_call_operand.vmem [shape: f32[24,2,32], index: 2, kind: output, shape index: {0}]
  %s3 = inlined_call_operand.vmem [shape: f32[2,32], index: 3, kind: output, shape index: {1}]
  %s4 = inlined_call_operand.vmem [shape: f32[2,32], index: 4, kind: output, shape index: {2}]
  %5 = xla_tuple %s2, %s3, %s4
  %s6 = sld [smem:[#allocation0]]
  $region34: #{encoder_forward.1} parent=0
    _
  %s8 = ssub.s32 1, %s6
  %s9 = scalar_select 0, %s8, %s6
  // Predicated region
  $region2: #{encoder_forward.1} parent=0 // pred_check
    _
  $region3: #{encoder_forward.1} parent=0 // pred_check_branch
    %11 = sbr.rel (0) target = $region5
  $region4: #{encoder_forward.1} parent=0 // pred_region
    _
  $region5: #{encoder_forward.1} parent=0 // pred_fallthru
    _
  // Predicated region
  $region6: #{encoder_forward.1} parent=0 // pred_check
    _
  $region7: #{encoder_forward.1} parent=0 // pred_check_branch
    %13 = sbr.rel (0) target = $region9
  $region8: #{encoder_forward.1} parent=0 // pred_region
    _
  $region9: #{encoder_forward.1} parent=0 // pred_fallthru
    _
  %v14 = vld [vmem:[%s1] sm:$0xff]
  %v15 = vld [vmem:[%s1 + $0x8] sm:$0xff]
  %v16 = vld [vmem:[%s1 + $0x10] sm:$0xff]
  %v17 = vld [vmem:[%s1 + $0x18] sm:$0xff]
  %vm18 = vcmask 261120
  %v20 = vsel %vm18, 0.0, 0
  %22 = vmatpush.msra.mxu0 0.0
  %23 = vmatpush.msra.mxu0 0.0
  %24 = vmatpush.msra.mxu0 0.0
  %25 = vmatpush.msra.mxu0 0.0
  %26 = vmatpush.msra.mxu0 0.0
  %27 = vmatpush.msra.mxu0 0.0
  %28 = vmatpush.msra.mxu0 0.0
  %29 = vmatpush.msra.mxu0 0.0
  %30 = vmatpush.msra.mxu0 0.0
  %31 = vmatpush.msra.mxu0 0.0
  %32 = vmatpush.msra.mxu0 0.0
  %33 = vmatpush.msra.mxu0 0.0
  %34 = vmatpush.msra.mxu0 %v17
  %35 = vmatpush.msra.mxu0 %v16
  %36 = vmatpush.msra.mxu0 %v15
  %37 = vmatpush.msra.mxu0 %v14
  %38 = vmatmul.f32.gmra.mxu0 %v20
  %v39 = vpop.f32.mrf.mxu0
  %v40 = vadd.f32 0.0, %v39
  %41 = vdwg.mxu0
  %v42 = vld [vmem:[%s0] sm:$0x3]
  %v43 = vadd.f32 %v42, %v40
  %v44 = vxor.u32 %v43, 2147483648
  %v45 = vmul.f32 %v44, 1.442695
  %v46 = vpow.pop %v45
  %v47 = vadd.f32 %v46, 1.0
  %v48 = vrcp.pop %v47
  %v49 = vmul.f32 %v47, %v48
  %v50 = vsub.f32 1.0, %v49
  %v51 = vmul.f32 %v48, %v50
  %v52 = vadd.f32 %v48, %v51
  %vm53 = vweird.f32 %v47
  %vm54 = vweird.f32 %v48
  %vm55 = vmor %vm53, %vm54
  %v56 = vsel %vm55, %v48, %v52
  %v57 = vand.u32 2147483647, %v47
  %vm58 = vcmp.eq.f32.partialorder %v57, 8.507059e+37
  %v59 = vand.u32 %v47, 2147483648
  %v60 = vor.u32 1.1754944e-38, %v59
  %v61 = vsel %vm58, %v60, %v56
  %v62 = vmul.f32 1.0, %v61
  %v63 = vtanh.pop %v43
  %v64 = vmul.f32 %v62, 0.0
  %66 = vrot.lane.b32.xlu0 %v63, 64
  %v67 = vpop.permute.xlu0 %66
  %v69 = vmul.f32 %v62, %v67
  %71 = vrot.lane.b32.xlu0 %v69, 32
  %v72 = vpop.permute.xlu0 %71
  %v74 = vadd.f32 %v64, %v72
  %v75 = vtanh.pop %v74
  %77 = vrot.lane.b32.xlu0 %v75, 64
  %v78 = vpop.permute.xlu0 %77
  %v80 = vmul.f32 %v62, %v78
  %82 = vrot.lane.b32.xlu0 %v80, 32
  %v83 = vpop.permute.xlu0 %82
  %vm85 = vcmask 254976
  %86 = vst.msk [vmem:[%s2] sm:$0x3] %vm85, %v83
  %v87 = vsel %vm18, %v83, 0
  %89 = vmatpush.msra.mxu0 0.0
  %90 = vmatpush.msra.mxu0 0.0
  %91 = vmatpush.msra.mxu0 0.0
  %92 = vmatpush.msra.mxu0 0.0
  %93 = vmatpush.msra.mxu0 0.0
  %94 = vmatpush.msra.mxu0 0.0
  %95 = vmatpush.msra.mxu0 0.0
  %96 = vmatpush.msra.mxu0 0.0
  %97 = vmatpush.msra.mxu0 0.0
  %98 = vmatpush.msra.mxu0 0.0
  %99 = vmatpush.msra.mxu0 0.0
  %100 = vmatpush.msra.mxu0 0.0
  %101 = vmatpush.msra.mxu0 %v17
  %102 = vmatpush.msra.mxu0 %v16
  %103 = vmatpush.msra.mxu0 %v15
  %104 = vmatpush.msra.mxu0 %v14
  %105 = vmatmul.f32.gmra.mxu0 %v87
  %v106 = vpop.f32.mrf.mxu0
  %v107 = vadd.f32 0.0, %v106
  %108 = vdwg.mxu0
  %s109 = scalar_lea.vmem %s0, 2
  %v110 = vld [vmem:[%s109] sm:$0x3]
  %v111 = vadd.f32 %v110, %v107
  %v112 = vxor.u32 %v111, 2147483648
  %v113 = vmul.f32 %v112, 1.442695
  %v114 = vpow.pop %v113
  %v115 = vadd.f32 %v114, 1.0
  %v116 = vrcp.pop %v115
  %v117 = vmul.f32 %v115, %v116
  %v118 = vsub.f32 1.0, %v117
  %v119 = vmul.f32 %v116, %v118
  %v120 = vadd.f32 %v116, %v119
  %vm121 = vweird.f32 %v115
  %vm122 = vweird.f32 %v116
  %vm123 = vmor %vm121, %vm122
  %v124 = vsel %vm123, %v116, %v120
  %v125 = vand.u32 2147483647, %v115
  %vm126 = vcmp.eq.f32.partialorder %v125, 8.507059e+37
  %v127 = vand.u32 %v115, 2147483648
  %v128 = vor.u32 1.1754944e-38, %v127
  %v129 = vsel %vm126, %v128, %v124
  %v130 = vmul.f32 1.0, %v129
  %v131 = vtanh.pop %v111
  %v132 = vmul.f32 %v130, %v74
  %134 = vrot.lane.b32.xlu0 %v131, 64
  %v135 = vpop.permute.xlu0 %134
  %v137 = vmul.f32 %v130, %v135
  %139 = vrot.lane.b32.xlu0 %v137, 32
  %v140 = vpop.permute.xlu0 %139
  %v142 = vadd.f32 %v132, %v140
  %v143 = vtanh.pop %v142
  %145 = vrot.lane.b32.xlu0 %v143, 64
  %v146 = vpop.permute.xlu0 %145
  %v148 = vmul.f32 %v130, %v146
  %150 = vrot.lane.b32.xlu0 %v148, 32
  %v151 = vpop.permute.xlu0 %150
  %s153 = scalar_lea.vmem %s2, 2
  %154 = vst.msk [vmem:[%s153] sm:$0x3] %vm85, %v151
  %v155 = vsel %vm18, %v151, 0
  %157 = vmatpush.msra.mxu0 0.0
  %158 = vmatpush.msra.mxu0 0.0
  %159 = vmatpush.msra.mxu0 0.0
  %160 = vmatpush.msra.mxu0 0.0
  %161 = vmatpush.msra.mxu0 0.0
  %162 = vmatpush.msra.mxu0 0.0
  %163 = vmatpush.msra.mxu0 0.0
  %164 = vmatpush.msra.mxu0 0.0
  %165 = vmatpush.msra.mxu0 0.0
  %166 = vmatpush.msra.mxu0 0.0
  %167 = vmatpush.msra.mxu0 0.0
  %168 = vmatpush.msra.mxu0 0.0
  %169 = vmatpush.msra.mxu0 %v17
  %170 = vmatpush.msra.mxu0 %v16
  %171 = vmatpush.msra.mxu0 %v15
  %172 = vmatpush.msra.mxu0 %v14
  %173 = vmatmul.f32.gmra.mxu0 %v155
  %v174 = vpop.f32.mrf.mxu0
  %v175 = vadd.f32 0.0, %v174
  %176 = vdwg.mxu0
  %s177 = scalar_lea.vmem %s0, 4
  %v178 = vld [vmem:[%s177] sm:$0x3]
  %v179 = vadd.f32 %v178, %v175
  %v180 = vxor.u32 %v179, 2147483648
  %v181 = vmul.f32 %v180, 1.442695
  %v182 = vpow.pop %v181
  %v183 = vadd.f32 %v182, 1.0
  %v184 = vrcp.pop %v183
  %v185 = vmul.f32 %v183, %v184
  %v186 = vsub.f32 1.0, %v185
  %v187 = vmul.f32 %v184, %v186
  %v188 = vadd.f32 %v184, %v187
  %vm189 = vweird.f32 %v183
  %vm190 = vweird.f32 %v184
  %vm191 = vmor %vm189, %vm190
  %v192 = vsel %vm191, %v184, %v188
  %v193 = vand.u32 2147483647, %v183
  %vm194 = vcmp.eq.f32.partialorder %v193, 8.507059e+37
  %v195 = vand.u32 %v183, 2147483648
  %v196 = vor.u32 1.1754944e-38, %v195
  %v197 = vsel %vm194, %v196, %v192
  %v198 = vmul.f32 1.0, %v197
  %v199 = vtanh.pop %v179
  %v200 = vmul.f32 %v198, %v142
  %202 = vrot.lane.b32.xlu0 %v199, 64
  %v203 = vpop.permute.xlu0 %202
  %v205 = vmul.f32 %v198, %v203
  %207 = vrot.lane.b32.xlu0 %v205, 32
  %v208 = vpop.permute.xlu0 %207
  %v210 = vadd.f32 %v200, %v208
  %v211 = vtanh.pop %v210
  %213 = vrot.lane.b32.xlu0 %v211, 64
  %v214 = vpop.permute.xlu0 %213
  %v216 = vmul.f32 %v198, %v214
  %218 = vrot.lane.b32.xlu0 %v216, 32
  %v219 = vpop.permute.xlu0 %218
  %s221 = scalar_lea.vmem %s2, 4
  %222 = vst.msk [vmem:[%s221] sm:$0x3] %vm85, %v219
  %v223 = vsel %vm18, %v219, 0
  %225 = vmatpush.msra.mxu0 0.0
  %226 = vmatpush.msra.mxu0 0.0
  %227 = vmatpush.msra.mxu0 0.0
  %228 = vmatpush.msra.mxu0 0.0
  %229 = vmatpush.msra.mxu0 0.0
  %230 = vmatpush.msra.mxu0 0.0
  %231 = vmatpush.msra.mxu0 0.0
  %232 = vmatpush.msra.mxu0 0.0
  %233 = vmatpush.msra.mxu0 0.0
  %234 = vmatpush.msra.mxu0 0.0
  %235 = vmatpush.msra.mxu0 0.0
  %236 = vmatpush.msra.mxu0 0.0
  %237 = vmatpush.msra.mxu0 %v17
  %238 = vmatpush.msra.mxu0 %v16
  %239 = vmatpush.msra.mxu0 %v15
  %240 = vmatpush.msra.mxu0 %v14
  %241 = vmatmul.f32.gmra.mxu0 %v223
  %v242 = vpop.f32.mrf.mxu0
  %v243 = vadd.f32 0.0, %v242
  %244 = vdwg.mxu0
  %s245 = scalar_lea.vmem %s0, 6
  %v246 = vld [vmem:[%s245] sm:$0x3]
  %v247 = vadd.f32 %v246, %v243
  %v248 = vxor.u32 %v247, 2147483648
  %v249 = vmul.f32 %v248, 1.442695
  %v250 = vpow.pop %v249
  %v251 = vadd.f32 %v250, 1.0
  %v252 = vrcp.pop %v251
  %v253 = vmul.f32 %v251, %v252
  %v254 = vsub.f32 1.0, %v253
  %v255 = vmul.f32 %v252, %v254
  %v256 = vadd.f32 %v252, %v255
  %vm257 = vweird.f32 %v251
  %vm258 = vweird.f32 %v252
  %vm259 = vmor %vm257, %vm258
  %v260 = vsel %vm259, %v252, %v256
  %v261 = vand.u32 2147483647, %v251
  %vm262 = vcmp.eq.f32.partialorder %v261, 8.507059e+37
  %v263 = vand.u32 %v251, 2147483648
  %v264 = vor.u32 1.1754944e-38, %v263
  %v265 = vsel %vm262, %v264, %v260
  %v266 = vmul.f32 1.0, %v265
  %v267 = vtanh.pop %v247
  %v268 = vmul.f32 %v266, %v210
  %270 = vrot.lane.b32.xlu0 %v267, 64
  %v271 = vpop.permute.xlu0 %270
  %v273 = vmul.f32 %v266, %v271
  %275 = vrot.lane.b32.xlu0 %v273, 32
  %v276 = vpop.permute.xlu0 %275
  %v278 = vadd.f32 %v268, %v276
  %v279 = vtanh.pop %v278
  %281 = vrot.lane.b32.xlu0 %v279, 64
  %v282 = vpop.permute.xlu0 %281
  %v284 = vmul.f32 %v266, %v282
  %286 = vrot.lane.b32.xlu0 %v284, 32
  %v287 = vpop.permute.xlu0 %286
  %s289 = scalar_lea.vmem %s2, 6
  %290 = vst.msk [vmem:[%s289] sm:$0x3] %vm85, %v287
  %v291 = vsel %vm18, %v287, 0
  %293 = vmatpush.msra.mxu0 0.0
  %294 = vmatpush.msra.mxu0 0.0
  %295 = vmatpush.msra.mxu0 0.0
  %296 = vmatpush.msra.mxu0 0.0
  %297 = vmatpush.msra.mxu0 0.0
  %298 = vmatpush.msra.mxu0 0.0
  %299 = vmatpush.msra.mxu0 0.0
  %300 = vmatpush.msra.mxu0 0.0
  %301 = vmatpush.msra.mxu0 0.0
  %302 = vmatpush.msra.mxu0 0.0
  %303 = vmatpush.msra.mxu0 0.0
  %304 = vmatpush.msra.mxu0 0.0
  %305 = vmatpush.msra.mxu0 %v17
  %306 = vmatpush.msra.mxu0 %v16
  %307 = vmatpush.msra.mxu0 %v15
  %308 = vmatpush.msra.mxu0 %v14
  %309 = vmatmul.f32.gmra.mxu0 %v291
  %v310 = vpop.f32.mrf.mxu0
  %v311 = vadd.f32 0.0, %v310
  %312 = vdwg.mxu0
  %s313 = scalar_lea.vmem %s0, 8
  %v314 = vld [vmem:[%s313] sm:$0x3]
  %v315 = vadd.f32 %v314, %v311
  %v316 = vxor.u32 %v315, 2147483648
  %v317 = vmul.f32 %v316, 1.442695
  %v318 = vpow.pop %v317
  %v319 = vadd.f32 %v318, 1.0
  %v320 = vrcp.pop %v319
  %v321 = vmul.f32 %v319, %v320
  %v322 = vsub.f32 1.0, %v321
  %v323 = vmul.f32 %v320, %v322
  %v324 = vadd.f32 %v320, %v323
  %vm325 = vweird.f32 %v319
  %vm326 = vweird.f32 %v320
  %vm327 = vmor %vm325, %vm326
  %v328 = vsel %vm327, %v320, %v324
  %v329 = vand.u32 2147483647, %v319
  %vm330 = vcmp.eq.f32.partialorder %v329, 8.507059e+37
  %v331 = vand.u32 %v319, 2147483648
  %v332 = vor.u32 1.1754944e-38, %v331
  %v333 = vsel %vm330, %v332, %v328
  %v334 = vmul.f32 1.0, %v333
  %v335 = vtanh.pop %v315
  %v336 = vmul.f32 %v334, %v278
  %338 = vrot.lane.b32.xlu0 %v335, 64
  %v339 = vpop.permute.xlu0 %338
  %v341 = vmul.f32 %v334, %v339
  %343 = vrot.lane.b32.xlu0 %v341, 32
  %v344 = vpop.permute.xlu0 %343
  %v346 = vadd.f32 %v336, %v344
  %v347 = vtanh.pop %v346
  %349 = vrot.lane.b32.xlu0 %v347, 64
  %v350 = vpop.permute.xlu0 %349
  %v352 = vmul.f32 %v334, %v350
  %354 = vrot.lane.b32.xlu0 %v352, 32
  %v355 = vpop.permute.xlu0 %354
  %s357 = scalar_lea.vmem %s2, 8
  %358 = vst.msk [vmem:[%s357] sm:$0x3] %vm85, %v355
  %v359 = vsel %vm18, %v355, 0
  %361 = vmatpush.msra.mxu0 0.0
  %362 = vmatpush.msra.mxu0 0.0
  %363 = vmatpush.msra.mxu0 0.0
  %364 = vmatpush.msra.mxu0 0.0
  %365 = vmatpush.msra.mxu0 0.0
  %366 = vmatpush.msra.mxu0 0.0
  %367 = vmatpush.msra.mxu0 0.0
  %368 = vmatpush.msra.mxu0 0.0
  %369 = vmatpush.msra.mxu0 0.0
  %370 = vmatpush.msra.mxu0 0.0
  %371 = vmatpush.msra.mxu0 0.0
  %372 = vmatpush.msra.mxu0 0.0
  %373 = vmatpush.msra.mxu0 %v17
  %374 = vmatpush.msra.mxu0 %v16
  %375 = vmatpush.msra.mxu0 %v15
  %376 = vmatpush.msra.mxu0 %v14
  %377 = vmatmul.f32.gmra.mxu0 %v359
  %v378 = vpop.f32.mrf.mxu0
  %v379 = vadd.f32 0.0, %v378
  %380 = vdwg.mxu0
  %s381 = scalar_lea.vmem %s0, 10
  %v382 = vld [vmem:[%s381] sm:$0x3]
  %v383 = vadd.f32 %v382, %v379
  %v384 = vxor.u32 %v383, 2147483648
  %v385 = vmul.f32 %v384, 1.442695
  %v386 = vpow.pop %v385
  %v387 = vadd.f32 %v386, 1.0
  %v388 = vrcp.pop %v387
  %v389 = vmul.f32 %v387, %v388
  %v390 = vsub.f32 1.0, %v389
  %v391 = vmul.f32 %v388, %v390
  %v392 = vadd.f32 %v388, %v391
  %vm393 = vweird.f32 %v387
  %vm394 = vweird.f32 %v388
  %vm395 = vmor %vm393, %vm394
  %v396 = vsel %vm395, %v388, %v392
  %v397 = vand.u32 2147483647, %v387
  %vm398 = vcmp.eq.f32.partialorder %v397, 8.507059e+37
  %v399 = vand.u32 %v387, 2147483648
  %v400 = vor.u32 1.1754944e-38, %v399
  %v401 = vsel %vm398, %v400, %v396
  %v402 = vmul.f32 1.0, %v401
  %v403 = vtanh.pop %v383
  %v404 = vmul.f32 %v402, %v346
  %406 = vrot.lane.b32.xlu0 %v403, 64
  %v407 = vpop.permute.xlu0 %406
  %v409 = vmul.f32 %v402, %v407
  %411 = vrot.lane.b32.xlu0 %v409, 32
  %v412 = vpop.permute.xlu0 %411
  %v414 = vadd.f32 %v404, %v412
  %v415 = vtanh.pop %v414
  %417 = vrot.lane.b32.xlu0 %v415, 64
  %v418 = vpop.permute.xlu0 %417
  %v420 = vmul.f32 %v402, %v418
  %422 = vrot.lane.b32.xlu0 %v420, 32
  %v423 = vpop.permute.xlu0 %422
  %s425 = scalar_lea.vmem %s2, 10
  %426 = vst.msk [vmem:[%s425] sm:$0x3] %vm85, %v423
  %v427 = vsel %vm18, %v423, 0
  %429 = vmatpush.msra.mxu0 0.0
  %430 = vmatpush.msra.mxu0 0.0
  %431 = vmatpush.msra.mxu0 0.0
  %432 = vmatpush.msra.mxu0 0.0
  %433 = vmatpush.msra.mxu0 0.0
  %434 = vmatpush.msra.mxu0 0.0
  %435 = vmatpush.msra.mxu0 0.0
  %436 = vmatpush.msra.mxu0 0.0
  %437 = vmatpush.msra.mxu0 0.0
  %438 = vmatpush.msra.mxu0 0.0
  %439 = vmatpush.msra.mxu0 0.0
  %440 = vmatpush.msra.mxu0 0.0
  %441 = vmatpush.msra.mxu0 %v17
  %442 = vmatpush.msra.mxu0 %v16
  %443 = vmatpush.msra.mxu0 %v15
  %444 = vmatpush.msra.mxu0 %v14
  %445 = vmatmul.f32.gmra.mxu0 %v427
  %v446 = vpop.f32.mrf.mxu0
  %v447 = vadd.f32 0.0, %v446
  %448 = vdwg.mxu0
  %s449 = scalar_lea.vmem %s0, 12
  %v450 = vld [vmem:[%s449] sm:$0x3]
  %v451 = vadd.f32 %v450, %v447
  %v452 = vxor.u32 %v451, 2147483648
  %v453 = vmul.f32 %v452, 1.442695
  %v454 = vpow.pop %v453
  %v455 = vadd.f32 %v454, 1.0
  %v456 = vrcp.pop %v455
  %v457 = vmul.f32 %v455, %v456
  %v458 = vsub.f32 1.0, %v457
  %v459 = vmul.f32 %v456, %v458
  %v460 = vadd.f32 %v456, %v459
  %vm461 = vweird.f32 %v455
  %vm462 = vweird.f32 %v456
  %vm463 = vmor %vm461, %vm462
  %v464 = vsel %vm463, %v456, %v460
  %v465 = vand.u32 2147483647, %v455
  %vm466 = vcmp.eq.f32.partialorder %v465, 8.507059e+37
  %v467 = vand.u32 %v455, 2147483648
  %v468 = vor.u32 1.1754944e-38, %v467
  %v469 = vsel %vm466, %v468, %v464
  %v470 = vmul.f32 1.0, %v469
  %v471 = vtanh.pop %v451
  %v472 = vmul.f32 %v470, %v414
  %474 = vrot.lane.b32.xlu0 %v471, 64
  %v475 = vpop.permute.xlu0 %474
  %v477 = vmul.f32 %v470, %v475
  %479 = vrot.lane.b32.xlu0 %v477, 32
  %v480 = vpop.permute.xlu0 %479
  %v482 = vadd.f32 %v472, %v480
  %v483 = vtanh.pop %v482
  %485 = vrot.lane.b32.xlu0 %v483, 64
  %v486 = vpop.permute.xlu0 %485
  %v488 = vmul.f32 %v470, %v486
  %490 = vrot.lane.b32.xlu0 %v488, 32
  %v491 = vpop.permute.xlu0 %490
  %s493 = scalar_lea.vmem %s2, 12
  %494 = vst.msk [vmem:[%s493] sm:$0x3] %vm85, %v491
  %v495 = vsel %vm18, %v491, 0
  %497 = vmatpush.msra.mxu0 0.0
  %498 = vmatpush.msra.mxu0 0.0
  %499 = vmatpush.msra.mxu0 0.0
  %500 = vmatpush.msra.mxu0 0.0
  %501 = vmatpush.msra.mxu0 0.0
  %502 = vmatpush.msra.mxu0 0.0
  %503 = vmatpush.msra.mxu0 0.0
  %504 = vmatpush.msra.mxu0 0.0
  %505 = vmatpush.msra.mxu0 0.0
  %506 = vmatpush.msra.mxu0 0.0
  %507 = vmatpush.msra.mxu0 0.0
  %508 = vmatpush.msra.mxu0 0.0
  %509 = vmatpush.msra.mxu0 %v17
  %510 = vmatpush.msra.mxu0 %v16
  %511 = vmatpush.msra.mxu0 %v15
  %512 = vmatpush.msra.mxu0 %v14
  %513 = vmatmul.f32.gmra.mxu0 %v495
  %v514 = vpop.f32.mrf.mxu0
  %v515 = vadd.f32 0.0, %v514
  %516 = vdwg.mxu0
  %s517 = scalar_lea.vmem %s0, 14
  %v518 = vld [vmem:[%s517] sm:$0x3]
  %v519 = vadd.f32 %v518, %v515
  %v520 = vxor.u32 %v519, 2147483648
  %v521 = vmul.f32 %v520, 1.442695
  %v522 = vpow.pop %v521
  %v523 = vadd.f32 %v522, 1.0
  %v524 = vrcp.pop %v523
  %v525 = vmul.f32 %v523, %v524
  %v526 = vsub.f32 1.0, %v525
  %v527 = vmul.f32 %v524, %v526
  %v528 = vadd.f32 %v524, %v527
  %vm529 = vweird.f32 %v523
  %vm530 = vweird.f32 %v524
  %vm531 = vmor %vm529, %vm530
  %v532 = vsel %vm531, %v524, %v528
  %v533 = vand.u32 2147483647, %v523
  %vm534 = vcmp.eq.f32.partialorder %v533, 8.507059e+37
  %v535 = vand.u32 %v523, 2147483648
  %v536 = vor.u32 1.1754944e-38, %v535
  %v537 = vsel %vm534, %v536, %v532
  %v538 = vmul.f32 1.0, %v537
  %v539 = vtanh.pop %v519
  %v540 = vmul.f32 %v538, %v482
  %542 = vrot.lane.b32.xlu0 %v539, 64
  %v543 = vpop.permute.xlu0 %542
  %v545 = vmul.f32 %v538, %v543
  %547 = vrot.lane.b32.xlu0 %v545, 32
  %v548 = vpop.permute.xlu0 %547
  %v550 = vadd.f32 %v540, %v548
  %v551 = vtanh.pop %v550
  %553 = vrot.lane.b32.xlu0 %v551, 64
  %v554 = vpop.permute.xlu0 %553
  %v556 = vmul.f32 %v538, %v554
  %558 = vrot.lane.b32.xlu0 %v556, 32
  %v559 = vpop.permute.xlu0 %558
  %s561 = scalar_lea.vmem %s2, 14
  %562 = vst.msk [vmem:[%s561] sm:$0x3] %vm85, %v559
  %v563 = vsel %vm18, %v559, 0
  %565 = vmatpush.msra.mxu0 0.0
  %566 = vmatpush.msra.mxu0 0.0
  %567 = vmatpush.msra.mxu0 0.0
  %568 = vmatpush.msra.mxu0 0.0
  %569 = vmatpush.msra.mxu0 0.0
  %570 = vmatpush.msra.mxu0 0.0
  %571 = vmatpush.msra.mxu0 0.0
  %572 = vmatpush.msra.mxu0 0.0
  %573 = vmatpush.msra.mxu0 0.0
  %574 = vmatpush.msra.mxu0 0.0
  %575 = vmatpush.msra.mxu0 0.0
  %576 = vmatpush.msra.mxu0 0.0
  %577 = vmatpush.msra.mxu0 %v17
  %578 = vmatpush.msra.mxu0 %v16
  %579 = vmatpush.msra.mxu0 %v15
  %580 = vmatpush.msra.mxu0 %v14
  %581 = vmatmul.f32.gmra.mxu0 %v563
  %v582 = vpop.f32.mrf.mxu0
  %v583 = vadd.f32 0.0, %v582
  %584 = vdwg.mxu0
  %s585 = scalar_lea.vmem %s0, 16
  %v586 = vld [vmem:[%s585] sm:$0x3]
  %v587 = vadd.f32 %v586, %v583
  %v588 = vxor.u32 %v587, 2147483648
  %v589 = vmul.f32 %v588, 1.442695
  %v590 = vpow.pop %v589
  %v591 = vadd.f32 %v590, 1.0
  %v592 = vrcp.pop %v591
  %v593 = vmul.f32 %v591, %v592
  %v594 = vsub.f32 1.0, %v593
  %v595 = vmul.f32 %v592, %v594
  %v596 = vadd.f32 %v592, %v595
  %vm597 = vweird.f32 %v591
  %vm598 = vweird.f32 %v592
  %vm599 = vmor %vm597, %vm598
  %v600 = vsel %vm599, %v592, %v596
  %v601 = vand.u32 2147483647, %v591
  %vm602 = vcmp.eq.f32.partialorder %v601, 8.507059e+37
  %v603 = vand.u32 %v591, 2147483648
  %v604 = vor.u32 1.1754944e-38, %v603
  %v605 = vsel %vm602, %v604, %v600
  %v606 = vmul.f32 1.0, %v605
  %v607 = vtanh.pop %v587
  %v608 = vmul.f32 %v606, %v550
  %610 = vrot.lane.b32.xlu0 %v607, 64
  %v611 = vpop.permute.xlu0 %610
  %v613 = vmul.f32 %v606, %v611
  %615 = vrot.lane.b32.xlu0 %v613, 32
  %v616 = vpop.permute.xlu0 %615
  %v618 = vadd.f32 %v608, %v616
  %v619 = vtanh.pop %v618
  %621 = vrot.lane.b32.xlu0 %v619, 64
  %v622 = vpop.permute.xlu0 %621
  %v624 = vmul.f32 %v606, %v622
  %626 = vrot.lane.b32.xlu0 %v624, 32
  %v627 = vpop.permute.xlu0 %626
  %s629 = scalar_lea.vmem %s2, 16
  %630 = vst.msk [vmem:[%s629] sm:$0x3] %vm85, %v627
  %v631 = vsel %vm18, %v627, 0
  %633 = vmatpush.msra.mxu0 0.0
  %634 = vmatpush.msra.mxu0 0.0
  %635 = vmatpush.msra.mxu0 0.0
  %636 = vmatpush.msra.mxu0 0.0
  %637 = vmatpush.msra.mxu0 0.0
  %638 = vmatpush.msra.mxu0 0.0
  %639 = vmatpush.msra.mxu0 0.0
  %640 = vmatpush.msra.mxu0 0.0
  %641 = vmatpush.msra.mxu0 0.0
  %642 = vmatpush.msra.mxu0 0.0
  %643 = vmatpush.msra.mxu0 0.0
  %644 = vmatpush.msra.mxu0 0.0
  %645 = vmatpush.msra.mxu0 %v17
  %646 = vmatpush.msra.mxu0 %v16
  %647 = vmatpush.msra.mxu0 %v15
  %648 = vmatpush.msra.mxu0 %v14
  %649 = vmatmul.f32.gmra.mxu0 %v631
  %v650 = vpop.f32.mrf.mxu0
  %v651 = vadd.f32 0.0, %v650
  %652 = vdwg.mxu0
  %s653 = scalar_lea.vmem %s0, 18
  %v654 = vld [vmem:[%s653] sm:$0x3]
  %v655 = vadd.f32 %v654, %v651
  %v656 = vxor.u32 %v655, 2147483648
  %v657 = vmul.f32 %v656, 1.442695
  %v658 = vpow.pop %v657
  %v659 = vadd.f32 %v658, 1.0
  %v660 = vrcp.pop %v659
  %v661 = vmul.f32 %v659, %v660
  %v662 = vsub.f32 1.0, %v661
  %v663 = vmul.f32 %v660, %v662
  %v664 = vadd.f32 %v660, %v663
  %vm665 = vweird.f32 %v659
  %vm666 = vweird.f32 %v660
  %vm667 = vmor %vm665, %vm666
  %v668 = vsel %vm667, %v660, %v664
  %v669 = vand.u32 2147483647, %v659
  %vm670 = vcmp.eq.f32.partialorder %v669, 8.507059e+37
  %v671 = vand.u32 %v659, 2147483648
  %v672 = vor.u32 1.1754944e-38, %v671
  %v673 = vsel %vm670, %v672, %v668
  %v674 = vmul.f32 1.0, %v673
  %v675 = vtanh.pop %v655
  %v676 = vmul.f32 %v674, %v618
  %678 = vrot.lane.b32.xlu0 %v675, 64
  %v679 = vpop.permute.xlu0 %678
  %v681 = vmul.f32 %v674, %v679
  %683 = vrot.lane.b32.xlu0 %v681, 32
  %v684 = vpop.permute.xlu0 %683
  %v686 = vadd.f32 %v676, %v684
  %v687 = vtanh.pop %v686
  %689 = vrot.lane.b32.xlu0 %v687, 64
  %v690 = vpop.permute.xlu0 %689
  %v692 = vmul.f32 %v674, %v690
  %694 = vrot.lane.b32.xlu0 %v692, 32
  %v695 = vpop.permute.xlu0 %694
  %s697 = scalar_lea.vmem %s2, 18
  %698 = vst.msk [vmem:[%s697] sm:$0x3] %vm85, %v695
  %v699 = vsel %vm18, %v695, 0
  %701 = vmatpush.msra.mxu0 0.0
  %702 = vmatpush.msra.mxu0 0.0
  %703 = vmatpush.msra.mxu0 0.0
  %704 = vmatpush.msra.mxu0 0.0
  %705 = vmatpush.msra.mxu0 0.0
  %706 = vmatpush.msra.mxu0 0.0
  %707 = vmatpush.msra.mxu0 0.0
  %708 = vmatpush.msra.mxu0 0.0
  %709 = vmatpush.msra.mxu0 0.0
  %710 = vmatpush.msra.mxu0 0.0
  %711 = vmatpush.msra.mxu0 0.0
  %712 = vmatpush.msra.mxu0 0.0
  %713 = vmatpush.msra.mxu0 %v17
  %714 = vmatpush.msra.mxu0 %v16
  %715 = vmatpush.msra.mxu0 %v15
  %716 = vmatpush.msra.mxu0 %v14
  %717 = vmatmul.f32.gmra.mxu0 %v699
  %v718 = vpop.f32.mrf.mxu0
  %v719 = vadd.f32 0.0, %v718
  %720 = vdwg.mxu0
  %s721 = scalar_lea.vmem %s0, 20
  %v722 = vld [vmem:[%s721] sm:$0x3]
  %v723 = vadd.f32 %v722, %v719
  %v724 = vxor.u32 %v723, 2147483648
  %v725 = vmul.f32 %v724, 1.442695
  %v726 = vpow.pop %v725
  %v727 = vadd.f32 %v726, 1.0
  %v728 = vrcp.pop %v727
  %v729 = vmul.f32 %v727, %v728
  %v730 = vsub.f32 1.0, %v729
  %v731 = vmul.f32 %v728, %v730
  %v732 = vadd.f32 %v728, %v731
  %vm733 = vweird.f32 %v727
  %vm734 = vweird.f32 %v728
  %vm735 = vmor %vm733, %vm734
  %v736 = vsel %vm735, %v728, %v732
  %v737 = vand.u32 2147483647, %v727
  %vm738 = vcmp.eq.f32.partialorder %v737, 8.507059e+37
  %v739 = vand.u32 %v727, 2147483648
  %v740 = vor.u32 1.1754944e-38, %v739
  %v741 = vsel %vm738, %v740, %v736
  %v742 = vmul.f32 1.0, %v741
  %v743 = vtanh.pop %v723
  %v744 = vmul.f32 %v742, %v686
  %746 = vrot.lane.b32.xlu0 %v743, 64
  %v747 = vpop.permute.xlu0 %746
  %v749 = vmul.f32 %v742, %v747
  %751 = vrot.lane.b32.xlu0 %v749, 32
  %v752 = vpop.permute.xlu0 %751
  %v754 = vadd.f32 %v744, %v752
  %v755 = vtanh.pop %v754
  %757 = vrot.lane.b32.xlu0 %v755, 64
  %v758 = vpop.permute.xlu0 %757
  %v760 = vmul.f32 %v742, %v758
  %762 = vrot.lane.b32.xlu0 %v760, 32
  %v763 = vpop.permute.xlu0 %762
  %s765 = scalar_lea.vmem %s2, 20
  %766 = vst.msk [vmem:[%s765] sm:$0x3] %vm85, %v763
  %v767 = vsel %vm18, %v763, 0
  %769 = vmatpush.msra.mxu0 0.0
  %770 = vmatpush.msra.mxu0 0.0
  %771 = vmatpush.msra.mxu0 0.0
  %772 = vmatpush.msra.mxu0 0.0
  %773 = vmatpush.msra.mxu0 0.0
  %774 = vmatpush.msra.mxu0 0.0
  %775 = vmatpush.msra.mxu0 0.0
  %776 = vmatpush.msra.mxu0 0.0
  %777 = vmatpush.msra.mxu0 0.0
  %778 = vmatpush.msra.mxu0 0.0
  %779 = vmatpush.msra.mxu0 0.0
  %780 = vmatpush.msra.mxu0 0.0
  %781 = vmatpush.msra.mxu0 %v17
  %782 = vmatpush.msra.mxu0 %v16
  %783 = vmatpush.msra.mxu0 %v15
  %784 = vmatpush.msra.mxu0 %v14
  %785 = vmatmul.f32.gmra.mxu0 %v767
  %v786 = vpop.f32.mrf.mxu0
  %v787 = vadd.f32 0.0, %v786
  %788 = vdwg.mxu0
  %s789 = scalar_lea.vmem %s0, 22
  %v790 = vld [vmem:[%s789] sm:$0x3]
  %v791 = vadd.f32 %v790, %v787
  %v792 = vxor.u32 %v791, 2147483648
  %v793 = vmul.f32 %v792, 1.442695
  %v794 = vpow.pop %v793
  %v795 = vadd.f32 %v794, 1.0
  %v796 = vrcp.pop %v795
  %v797 = vmul.f32 %v795, %v796
  %v798 = vsub.f32 1.0, %v797
  %v799 = vmul.f32 %v796, %v798
  %v800 = vadd.f32 %v796, %v799
  %vm801 = vweird.f32 %v795
  %vm802 = vweird.f32 %v796
  %vm803 = vmor %vm801, %vm802
  %v804 = vsel %vm803, %v796, %v800
  %v805 = vand.u32 2147483647, %v795
  %vm806 = vcmp.eq.f32.partialorder %v805, 8.507059e+37
  %v807 = vand.u32 %v795, 2147483648
  %v808 = vor.u32 1.1754944e-38, %v807
  %v809 = vsel %vm806, %v808, %v804
  %v810 = vmul.f32 1.0, %v809
  %v811 = vtanh.pop %v791
  %v812 = vmul.f32 %v810, %v754
  %814 = vrot.lane.b32.xlu0 %v811, 64
  %v815 = vpop.permute.xlu0 %814
  %v817 = vmul.f32 %v810, %v815
  %819 = vrot.lane.b32.xlu0 %v817, 32
  %v820 = vpop.permute.xlu0 %819
  %v822 = vadd.f32 %v812, %v820
  %v823 = vtanh.pop %v822
  %825 = vrot.lane.b32.xlu0 %v823, 64
  %v826 = vpop.permute.xlu0 %825
  %v828 = vmul.f32 %v810, %v826
  %830 = vrot.lane.b32.xlu0 %v828, 32
  %v831 = vpop.permute.xlu0 %830
  %s833 = scalar_lea.vmem %s2, 22
  %834 = vst.msk [vmem:[%s833] sm:$0x3] %vm85, %v831
  %v835 = vsel %vm18, %v831, 0
  %837 = vmatpush.msra.mxu0 0.0
  %838 = vmatpush.msra.mxu0 0.0
  %839 = vmatpush.msra.mxu0 0.0
  %840 = vmatpush.msra.mxu0 0.0
  %841 = vmatpush.msra.mxu0 0.0
  %842 = vmatpush.msra.mxu0 0.0
  %843 = vmatpush.msra.mxu0 0.0
  %844 = vmatpush.msra.mxu0 0.0
  %845 = vmatpush.msra.mxu0 0.0
  %846 = vmatpush.msra.mxu0 0.0
  %847 = vmatpush.msra.mxu0 0.0
  %848 = vmatpush.msra.mxu0 0.0
  %849 = vmatpush.msra.mxu0 %v17
  %850 = vmatpush.msra.mxu0 %v16
  %851 = vmatpush.msra.mxu0 %v15
  %852 = vmatpush.msra.mxu0 %v14
  %853 = vmatmul.f32.gmra.mxu0 %v835
  %v854 = vpop.f32.mrf.mxu0
  %v855 = vadd.f32 0.0, %v854
  %856 = vdwg.mxu0
  %s857 = scalar_lea.vmem %s0, 24
  %v858 = vld [vmem:[%s857] sm:$0x3]
  %v859 = vadd.f32 %v858, %v855
  %v860 = vxor.u32 %v859, 2147483648
  %v861 = vmul.f32 %v860, 1.442695
  %v862 = vpow.pop %v861
  %v863 = vadd.f32 %v862, 1.0
  %v864 = vrcp.pop %v863
  %v865 = vmul.f32 %v863, %v864
  %v866 = vsub.f32 1.0, %v865
  %v867 = vmul.f32 %v864, %v866
  %v868 = vadd.f32 %v864, %v867
  %vm869 = vweird.f32 %v863
  %vm870 = vweird.f32 %v864
  %vm871 = vmor %vm869, %vm870
  %v872 = vsel %vm871, %v864, %v868
  %v873 = vand.u32 2147483647, %v863
  %vm874 = vcmp.eq.f32.partialorder %v873, 8.507059e+37
  %v875 = vand.u32 %v863, 2147483648
  %v876 = vor.u32 1.1754944e-38, %v875
  %v877 = vsel %vm874, %v876, %v872
  %v878 = vmul.f32 1.0, %v877
  %v879 = vtanh.pop %v859
  %v880 = vmul.f32 %v878, %v822
  %882 = vrot.lane.b32.xlu0 %v879, 64
  %v883 = vpop.permute.xlu0 %882
  %v885 = vmul.f32 %v878, %v883
  %887 = vrot.lane.b32.xlu0 %v885, 32
  %v888 = vpop.permute.xlu0 %887
  %v890 = vadd.f32 %v880, %v888
  %v891 = vtanh.pop %v890
  %893 = vrot.lane.b32.xlu0 %v891, 64
  %v894 = vpop.permute.xlu0 %893
  %v896 = vmul.f32 %v878, %v894
  %898 = vrot.lane.b32.xlu0 %v896, 32
  %v899 = vpop.permute.xlu0 %898
  %s901 = scalar_lea.vmem %s2, 24
  %902 = vst.msk [vmem:[%s901] sm:$0x3] %vm85, %v899
  %v903 = vsel %vm18, %v899, 0
  %905 = vmatpush.msra.mxu0 0.0
  %906 = vmatpush.msra.mxu0 0.0
  %907 = vmatpush.msra.mxu0 0.0
  %908 = vmatpush.msra.mxu0 0.0
  %909 = vmatpush.msra.mxu0 0.0
  %910 = vmatpush.msra.mxu0 0.0
  %911 = vmatpush.msra.mxu0 0.0
  %912 = vmatpush.msra.mxu0 0.0
  %913 = vmatpush.msra.mxu0 0.0
  %914 = vmatpush.msra.mxu0 0.0
  %915 = vmatpush.msra.mxu0 0.0
  %916 = vmatpush.msra.mxu0 0.0
  %917 = vmatpush.msra.mxu0 %v17
  %918 = vmatpush.msra.mxu0 %v16
  %919 = vmatpush.msra.mxu0 %v15
  %920 = vmatpush.msra.mxu0 %v14
  %921 = vmatmul.f32.gmra.mxu0 %v903
  %v922 = vpop.f32.mrf.mxu0
  %v923 = vadd.f32 0.0, %v922
  %924 = vdwg.mxu0
  %s925 = scalar_lea.vmem %s0, 26
  %v926 = vld [vmem:[%s925] sm:$0x3]
  %v927 = vadd.f32 %v926, %v923
  %v928 = vxor.u32 %v927, 2147483648
  %v929 = vmul.f32 %v928, 1.442695
  %v930 = vpow.pop %v929
  %v931 = vadd.f32 %v930, 1.0
  %v932 = vrcp.pop %v931
  %v933 = vmul.f32 %v931, %v932
  %v934 = vsub.f32 1.0, %v933
  %v935 = vmul.f32 %v932, %v934
  %v936 = vadd.f32 %v932, %v935
  %vm937 = vweird.f32 %v931
  %vm938 = vweird.f32 %v932
  %vm939 = vmor %vm937, %vm938
  %v940 = vsel %vm939, %v932, %v936
  %v941 = vand.u32 2147483647, %v931
  %vm942 = vcmp.eq.f32.partialorder %v941, 8.507059e+37
  %v943 = vand.u32 %v931, 2147483648
  %v944 = vor.u32 1.1754944e-38, %v943
  %v945 = vsel %vm942, %v944, %v940
  %v946 = vmul.f32 1.0, %v945
  %v947 = vtanh.pop %v927
  %v948 = vmul.f32 %v946, %v890
  %950 = vrot.lane.b32.xlu0 %v947, 64
  %v951 = vpop.permute.xlu0 %950
  %v953 = vmul.f32 %v946, %v951
  %955 = vrot.lane.b32.xlu0 %v953, 32
  %v956 = vpop.permute.xlu0 %955
  %v958 = vadd.f32 %v948, %v956
  %v959 = vtanh.pop %v958
  %961 = vrot.lane.b32.xlu0 %v959, 64
  %v962 = vpop.permute.xlu0 %961
  %v964 = vmul.f32 %v946, %v962
  %966 = vrot.lane.b32.xlu0 %v964, 32
  %v967 = vpop.permute.xlu0 %966
  %s969 = scalar_lea.vmem %s2, 26
  %970 = vst.msk [vmem:[%s969] sm:$0x3] %vm85, %v967
  %v971 = vsel %vm18, %v967, 0
  %973 = vmatpush.msra.mxu0 0.0
  %974 = vmatpush.msra.mxu0 0.0
  %975 = vmatpush.msra.mxu0 0.0
  %976 = vmatpush.msra.mxu0 0.0
  %977 = vmatpush.msra.mxu0 0.0
  %978 = vmatpush.msra.mxu0 0.0
  %979 = vmatpush.msra.mxu0 0.0
  %980 = vmatpush.msra.mxu0 0.0
  %981 = vmatpush.msra.mxu0 0.0
  %982 = vmatpush.msra.mxu0 0.0
  %983 = vmatpush.msra.mxu0 0.0
  %984 = vmatpush.msra.mxu0 0.0
  %985 = vmatpush.msra.mxu0 %v17
  %986 = vmatpush.msra.mxu0 %v16
  %987 = vmatpush.msra.mxu0 %v15
  %988 = vmatpush.msra.mxu0 %v14
  %989 = vmatmul.f32.gmra.mxu0 %v971
  %v990 = vpop.f32.mrf.mxu0
  %v991 = vadd.f32 0.0, %v990
  %992 = vdwg.mxu0
  %s993 = scalar_lea.vmem %s0, 28
  %v994 = vld [vmem:[%s993] sm:$0x3]
  %v995 = vadd.f32 %v994, %v991
  %v996 = vxor.u32 %v995, 2147483648
  %v997 = vmul.f32 %v996, 1.442695
  %v998 = vpow.pop %v997
  %v999 = vadd.f32 %v998, 1.0
  %v1000 = vrcp.pop %v999
  %v1001 = vmul.f32 %v999, %v1000
  %v1002 = vsub.f32 1.0, %v1001
  %v1003 = vmul.f32 %v1000, %v1002
  %v1004 = vadd.f32 %v1000, %v1003
  %vm1005 = vweird.f32 %v999
  %vm1006 = vweird.f32 %v1000
  %vm1007 = vmor %vm1005, %vm1006
  %v1008 = vsel %vm1007, %v1000, %v1004
  %v1009 = vand.u32 2147483647, %v999
  %vm1010 = vcmp.eq.f32.partialorder %v1009, 8.507059e+37
  %v1011 = vand.u32 %v999, 2147483648
  %v1012 = vor.u32 1.1754944e-38, %v1011
  %v1013 = vsel %vm1010, %v1012, %v1008
  %v1014 = vmul.f32 1.0, %v1013
  %v1015 = vtanh.pop %v995
  %v1016 = vmul.f32 %v1014, %v958
  %1018 = vrot.lane.b32.xlu0 %v1015, 64
  %v1019 = vpop.permute.xlu0 %1018
  %v1021 = vmul.f32 %v1014, %v1019
  %1023 = vrot.lane.b32.xlu0 %v1021, 32
  %v1024 = vpop.permute.xlu0 %1023
  %v1026 = vadd.f32 %v1016, %v1024
  %v1027 = vtanh.pop %v1026
  %1029 = vrot.lane.b32.xlu0 %v1027, 64
  %v1030 = vpop.permute.xlu0 %1029
  %v1032 = vmul.f32 %v1014, %v1030
  %1034 = vrot.lane.b32.xlu0 %v1032, 32
  %v1035 = vpop.permute.xlu0 %1034
  %s1037 = scalar_lea.vmem %s2, 28
  %1038 = vst.msk [vmem:[%s1037] sm:$0x3] %vm85, %v1035
  %v1039 = vsel %vm18, %v1035, 0
  %1041 = vmatpush.msra.mxu0 0.0
  %1042 = vmatpush.msra.mxu0 0.0
  %1043 = vmatpush.msra.mxu0 0.0
  %1044 = vmatpush.msra.mxu0 0.0
  %1045 = vmatpush.msra.mxu0 0.0
  %1046 = vmatpush.msra.mxu0 0.0
  %1047 = vmatpush.msra.mxu0 0.0
  %1048 = vmatpush.msra.mxu0 0.0
  %1049 = vmatpush.msra.mxu0 0.0
  %1050 = vmatpush.msra.mxu0 0.0
  %1051 = vmatpush.msra.mxu0 0.0
  %1052 = vmatpush.msra.mxu0 0.0
  %1053 = vmatpush.msra.mxu0 %v17
  %1054 = vmatpush.msra.mxu0 %v16
  %1055 = vmatpush.msra.mxu0 %v15
  %1056 = vmatpush.msra.mxu0 %v14
  %1057 = vmatmul.f32.gmra.mxu0 %v1039
  %v1058 = vpop.f32.mrf.mxu0
  %v1059 = vadd.f32 0.0, %v1058
  %1060 = vdwg.mxu0
  %s1061 = scalar_lea.vmem %s0, 30
  %v1062 = vld [vmem:[%s1061] sm:$0x3]
  %v1063 = vadd.f32 %v1062, %v1059
  %v1064 = vxor.u32 %v1063, 2147483648
  %v1065 = vmul.f32 %v1064, 1.442695
  %v1066 = vpow.pop %v1065
  %v1067 = vadd.f32 %v1066, 1.0
  %v1068 = vrcp.pop %v1067
  %v1069 = vmul.f32 %v1067, %v1068
  %v1070 = vsub.f32 1.0, %v1069
  %v1071 = vmul.f32 %v1068, %v1070
  %v1072 = vadd.f32 %v1068, %v1071
  %vm1073 = vweird.f32 %v1067
  %vm1074 = vweird.f32 %v1068
  %vm1075 = vmor %vm1073, %vm1074
  %v1076 = vsel %vm1075, %v1068, %v1072
  %v1077 = vand.u32 2147483647, %v1067
  %vm1078 = vcmp.eq.f32.partialorder %v1077, 8.507059e+37
  %v1079 = vand.u32 %v1067, 2147483648
  %v1080 = vor.u32 1.1754944e-38, %v1079
  %v1081 = vsel %vm1078, %v1080, %v1076
  %v1082 = vmul.f32 1.0, %v1081
  %v1083 = vtanh.pop %v1063
  %v1084 = vmul.f32 %v1082, %v1026
  %1086 = vrot.lane.b32.xlu0 %v1083, 64
  %v1087 = vpop.permute.xlu0 %1086
  %v1089 = vmul.f32 %v1082, %v1087
  %1091 = vrot.lane.b32.xlu0 %v1089, 32
  %v1092 = vpop.permute.xlu0 %1091
  %v1094 = vadd.f32 %v1084, %v1092
  %v1095 = vtanh.pop %v1094
  %1097 = vrot.lane.b32.xlu0 %v1095, 64
  %v1098 = vpop.permute.xlu0 %1097
  %v1100 = vmul.f32 %v1082, %v1098
  %1102 = vrot.lane.b32.xlu0 %v1100, 32
  %v1103 = vpop.permute.xlu0 %1102
  %s1105 = scalar_lea.vmem %s2, 30
  %1106 = vst.msk [vmem:[%s1105] sm:$0x3] %vm85, %v1103
  %v1107 = vsel %vm18, %v1103, 0
  %1109 = vmatpush.msra.mxu0 0.0
  %1110 = vmatpush.msra.mxu0 0.0
  %1111 = vmatpush.msra.mxu0 0.0
  %1112 = vmatpush.msra.mxu0 0.0
  %1113 = vmatpush.msra.mxu0 0.0
  %1114 = vmatpush.msra.mxu0 0.0
  %1115 = vmatpush.msra.mxu0 0.0
  %1116 = vmatpush.msra.mxu0 0.0
  %1117 = vmatpush.msra.mxu0 0.0
  %1118 = vmatpush.msra.mxu0 0.0
  %1119 = vmatpush.msra.mxu0 0.0
  %1120 = vmatpush.msra.mxu0 0.0
  %1121 = vmatpush.msra.mxu0 %v17
  %1122 = vmatpush.msra.mxu0 %v16
  %1123 = vmatpush.msra.mxu0 %v15
  %1124 = vmatpush.msra.mxu0 %v14
  %1125 = vmatmul.f32.gmra.mxu0 %v1107
  %v1126 = vpop.f32.mrf.mxu0
  %v1127 = vadd.f32 0.0, %v1126
  %1128 = vdwg.mxu0
  %s1129 = scalar_lea.vmem %s0, 32
  %v1130 = vld [vmem:[%s1129] sm:$0x3]
  %v1131 = vadd.f32 %v1130, %v1127
  %v1132 = vxor.u32 %v1131, 2147483648
  %v1133 = vmul.f32 %v1132, 1.442695
  %v1134 = vpow.pop %v1133
  %v1135 = vadd.f32 %v1134, 1.0
  %v1136 = vrcp.pop %v1135
  %v1137 = vmul.f32 %v1135, %v1136
  %v1138 = vsub.f32 1.0, %v1137
  %v1139 = vmul.f32 %v1136, %v1138
  %v1140 = vadd.f32 %v1136, %v1139
  %vm1141 = vweird.f32 %v1135
  %vm1142 = vweird.f32 %v1136
  %vm1143 = vmor %vm1141, %vm1142
  %v1144 = vsel %vm1143, %v1136, %v1140
  %v1145 = vand.u32 2147483647, %v1135
  %vm1146 = vcmp.eq.f32.partialorder %v1145, 8.507059e+37
  %v1147 = vand.u32 %v1135, 2147483648
  %v1148 = vor.u32 1.1754944e-38, %v1147
  %v1149 = vsel %vm1146, %v1148, %v1144
  %v1150 = vmul.f32 1.0, %v1149
  %v1151 = vtanh.pop %v1131
  %v1152 = vmul.f32 %v1150, %v1094
  %1154 = vrot.lane.b32.xlu0 %v1151, 64
  %v1155 = vpop.permute.xlu0 %1154
  %v1157 = vmul.f32 %v1150, %v1155
  %1159 = vrot.lane.b32.xlu0 %v1157, 32
  %v1160 = vpop.permute.xlu0 %1159
  %v1162 = vadd.f32 %v1152, %v1160
  %v1163 = vtanh.pop %v1162
  %1165 = vrot.lane.b32.xlu0 %v1163, 64
  %v1166 = vpop.permute.xlu0 %1165
  %v1168 = vmul.f32 %v1150, %v1166
  %1170 = vrot.lane.b32.xlu0 %v1168, 32
  %v1171 = vpop.permute.xlu0 %1170
  %s1173 = scalar_lea.vmem %s2, 32
  %1174 = vst.msk [vmem:[%s1173] sm:$0x3] %vm85, %v1171
  %v1175 = vsel %vm18, %v1171, 0
  %1177 = vmatpush.msra.mxu0 0.0
  %1178 = vmatpush.msra.mxu0 0.0
  %1179 = vmatpush.msra.mxu0 0.0
  %1180 = vmatpush.msra.mxu0 0.0
  %1181 = vmatpush.msra.mxu0 0.0
  %1182 = vmatpush.msra.mxu0 0.0
  %1183 = vmatpush.msra.mxu0 0.0
  %1184 = vmatpush.msra.mxu0 0.0
  %1185 = vmatpush.msra.mxu0 0.0
  %1186 = vmatpush.msra.mxu0 0.0
  %1187 = vmatpush.msra.mxu0 0.0
  %1188 = vmatpush.msra.mxu0 0.0
  %1189 = vmatpush.msra.mxu0 %v17
  %1190 = vmatpush.msra.mxu0 %v16
  %1191 = vmatpush.msra.mxu0 %v15
  %1192 = vmatpush.msra.mxu0 %v14
  %1193 = vmatmul.f32.gmra.mxu0 %v1175
  %v1194 = vpop.f32.mrf.mxu0
  %v1195 = vadd.f32 0.0, %v1194
  %1196 = vdwg.mxu0
  %s1197 = scalar_lea.vmem %s0, 34
  %v1198 = vld [vmem:[%s1197] sm:$0x3]
  %v1199 = vadd.f32 %v1198, %v1195
  %v1200 = vxor.u32 %v1199, 2147483648
  %v1201 = vmul.f32 %v1200, 1.442695
  %v1202 = vpow.pop %v1201
  %v1203 = vadd.f32 %v1202, 1.0
  %v1204 = vrcp.pop %v1203
  %v1205 = vmul.f32 %v1203, %v1204
  %v1206 = vsub.f32 1.0, %v1205
  %v1207 = vmul.f32 %v1204, %v1206
  %v1208 = vadd.f32 %v1204, %v1207
  %vm1209 = vweird.f32 %v1203
  %vm1210 = vweird.f32 %v1204
  %vm1211 = vmor %vm1209, %vm1210
  %v1212 = vsel %vm1211, %v1204, %v1208
  %v1213 = vand.u32 2147483647, %v1203
  %vm1214 = vcmp.eq.f32.partialorder %v1213, 8.507059e+37
  %v1215 = vand.u32 %v1203, 2147483648
  %v1216 = vor.u32 1.1754944e-38, %v1215
  %v1217 = vsel %vm1214, %v1216, %v1212
  %v1218 = vmul.f32 1.0, %v1217
  %v1219 = vtanh.pop %v1199
  %v1220 = vmul.f32 %v1218, %v1162
  %1222 = vrot.lane.b32.xlu0 %v1219, 64
  %v1223 = vpop.permute.xlu0 %1222
  %v1225 = vmul.f32 %v1218, %v1223
  %1227 = vrot.lane.b32.xlu0 %v1225, 32
  %v1228 = vpop.permute.xlu0 %1227
  %v1230 = vadd.f32 %v1220, %v1228
  %v1231 = vtanh.pop %v1230
  %1233 = vrot.lane.b32.xlu0 %v1231, 64
  %v1234 = vpop.permute.xlu0 %1233
  %v1236 = vmul.f32 %v1218, %v1234
  %1238 = vrot.lane.b32.xlu0 %v1236, 32
  %v1239 = vpop.permute.xlu0 %1238
  %s1241 = scalar_lea.vmem %s2, 34
  %1242 = vst.msk [vmem:[%s1241] sm:$0x3] %vm85, %v1239
  %v1243 = vsel %vm18, %v1239, 0
  %1245 = vmatpush.msra.mxu0 0.0
  %1246 = vmatpush.msra.mxu0 0.0
  %1247 = vmatpush.msra.mxu0 0.0
  %1248 = vmatpush.msra.mxu0 0.0
  %1249 = vmatpush.msra.mxu0 0.0
  %1250 = vmatpush.msra.mxu0 0.0
  %1251 = vmatpush.msra.mxu0 0.0
  %1252 = vmatpush.msra.mxu0 0.0
  %1253 = vmatpush.msra.mxu0 0.0
  %1254 = vmatpush.msra.mxu0 0.0
  %1255 = vmatpush.msra.mxu0 0.0
  %1256 = vmatpush.msra.mxu0 0.0
  %1257 = vmatpush.msra.mxu0 %v17
  %1258 = vmatpush.msra.mxu0 %v16
  %1259 = vmatpush.msra.mxu0 %v15
  %1260 = vmatpush.msra.mxu0 %v14
  %1261 = vmatmul.f32.gmra.mxu0 %v1243
  %v1262 = vpop.f32.mrf.mxu0
  %v1263 = vadd.f32 0.0, %v1262
  %1264 = vdwg.mxu0
  %s1265 = scalar_lea.vmem %s0, 36
  %v1266 = vld [vmem:[%s1265] sm:$0x3]
  %v1267 = vadd.f32 %v1266, %v1263
  %v1268 = vxor.u32 %v1267, 2147483648
  %v1269 = vmul.f32 %v1268, 1.442695
  %v1270 = vpow.pop %v1269
  %v1271 = vadd.f32 %v1270, 1.0
  %v1272 = vrcp.pop %v1271
  %v1273 = vmul.f32 %v1271, %v1272
  %v1274 = vsub.f32 1.0, %v1273
  %v1275 = vmul.f32 %v1272, %v1274
  %v1276 = vadd.f32 %v1272, %v1275
  %vm1277 = vweird.f32 %v1271
  %vm1278 = vweird.f32 %v1272
  %vm1279 = vmor %vm1277, %vm1278
  %v1280 = vsel %vm1279, %v1272, %v1276
  %v1281 = vand.u32 2147483647, %v1271
  %vm1282 = vcmp.eq.f32.partialorder %v1281, 8.507059e+37
  %v1283 = vand.u32 %v1271, 2147483648
  %v1284 = vor.u32 1.1754944e-38, %v1283
  %v1285 = vsel %vm1282, %v1284, %v1280
  %v1286 = vmul.f32 1.0, %v1285
  %v1287 = vtanh.pop %v1267
  %v1288 = vmul.f32 %v1286, %v1230
  %1290 = vrot.lane.b32.xlu0 %v1287, 64
  %v1291 = vpop.permute.xlu0 %1290
  %v1293 = vmul.f32 %v1286, %v1291
  %1295 = vrot.lane.b32.xlu0 %v1293, 32
  %v1296 = vpop.permute.xlu0 %1295
  %v1298 = vadd.f32 %v1288, %v1296
  %v1299 = vtanh.pop %v1298
  %1301 = vrot.lane.b32.xlu0 %v1299, 64
  %v1302 = vpop.permute.xlu0 %1301
  %v1304 = vmul.f32 %v1286, %v1302
  %1306 = vrot.lane.b32.xlu0 %v1304, 32
  %v1307 = vpop.permute.xlu0 %1306
  %s1309 = scalar_lea.vmem %s2, 36
  %1310 = vst.msk [vmem:[%s1309] sm:$0x3] %vm85, %v1307
  %v1311 = vsel %vm18, %v1307, 0
  %1313 = vmatpush.msra.mxu0 0.0
  %1314 = vmatpush.msra.mxu0 0.0
  %1315 = vmatpush.msra.mxu0 0.0
  %1316 = vmatpush.msra.mxu0 0.0
  %1317 = vmatpush.msra.mxu0 0.0
  %1318 = vmatpush.msra.mxu0 0.0
  %1319 = vmatpush.msra.mxu0 0.0
  %1320 = vmatpush.msra.mxu0 0.0
  %1321 = vmatpush.msra.mxu0 0.0
  %1322 = vmatpush.msra.mxu0 0.0
  %1323 = vmatpush.msra.mxu0 0.0
  %1324 = vmatpush.msra.mxu0 0.0
  %1325 = vmatpush.msra.mxu0 %v17
  %1326 = vmatpush.msra.mxu0 %v16
  %1327 = vmatpush.msra.mxu0 %v15
  %1328 = vmatpush.msra.mxu0 %v14
  %1329 = vmatmul.f32.gmra.mxu0 %v1311
  %v1330 = vpop.f32.mrf.mxu0
  %v1331 = vadd.f32 0.0, %v1330
  %1332 = vdwg.mxu0
  %s1333 = scalar_lea.vmem %s0, 38
  %v1334 = vld [vmem:[%s1333] sm:$0x3]
  %v1335 = vadd.f32 %v1334, %v1331
  %v1336 = vxor.u32 %v1335, 2147483648
  %v1337 = vmul.f32 %v1336, 1.442695
  %v1338 = vpow.pop %v1337
  %v1339 = vadd.f32 %v1338, 1.0
  %v1340 = vrcp.pop %v1339
  %v1341 = vmul.f32 %v1339, %v1340
  %v1342 = vsub.f32 1.0, %v1341
  %v1343 = vmul.f32 %v1340, %v1342
  %v1344 = vadd.f32 %v1340, %v1343
  %vm1345 = vweird.f32 %v1339
  %vm1346 = vweird.f32 %v1340
  %vm1347 = vmor %vm1345, %vm1346
  %v1348 = vsel %vm1347, %v1340, %v1344
  %v1349 = vand.u32 2147483647, %v1339
  %vm1350 = vcmp.eq.f32.partialorder %v1349, 8.507059e+37
  %v1351 = vand.u32 %v1339, 2147483648
  %v1352 = vor.u32 1.1754944e-38, %v1351
  %v1353 = vsel %vm1350, %v1352, %v1348
  %v1354 = vmul.f32 1.0, %v1353
  %v1355 = vtanh.pop %v1335
  %v1356 = vmul.f32 %v1354, %v1298
  %1358 = vrot.lane.b32.xlu0 %v1355, 64
  %v1359 = vpop.permute.xlu0 %1358
  %v1361 = vmul.f32 %v1354, %v1359
  %1363 = vrot.lane.b32.xlu0 %v1361, 32
  %v1364 = vpop.permute.xlu0 %1363
  %v1366 = vadd.f32 %v1356, %v1364
  %v1367 = vtanh.pop %v1366
  %1369 = vrot.lane.b32.xlu0 %v1367, 64
  %v1370 = vpop.permute.xlu0 %1369
  %v1372 = vmul.f32 %v1354, %v1370
  %1374 = vrot.lane.b32.xlu0 %v1372, 32
  %v1375 = vpop.permute.xlu0 %1374
  %s1377 = scalar_lea.vmem %s2, 38
  %1378 = vst.msk [vmem:[%s1377] sm:$0x3] %vm85, %v1375
  %v1379 = vsel %vm18, %v1375, 0
  %1381 = vmatpush.msra.mxu0 0.0
  %1382 = vmatpush.msra.mxu0 0.0
  %1383 = vmatpush.msra.mxu0 0.0
  %1384 = vmatpush.msra.mxu0 0.0
  %1385 = vmatpush.msra.mxu0 0.0
  %1386 = vmatpush.msra.mxu0 0.0
  %1387 = vmatpush.msra.mxu0 0.0
  %1388 = vmatpush.msra.mxu0 0.0
  %1389 = vmatpush.msra.mxu0 0.0
  %1390 = vmatpush.msra.mxu0 0.0
  %1391 = vmatpush.msra.mxu0 0.0
  %1392 = vmatpush.msra.mxu0 0.0
  %1393 = vmatpush.msra.mxu0 %v17
  %1394 = vmatpush.msra.mxu0 %v16
  %1395 = vmatpush.msra.mxu0 %v15
  %1396 = vmatpush.msra.mxu0 %v14
  %1397 = vmatmul.f32.gmra.mxu0 %v1379
  %v1398 = vpop.f32.mrf.mxu0
  %v1399 = vadd.f32 0.0, %v1398
  %1400 = vdwg.mxu0
  %s1401 = scalar_lea.vmem %s0, 40
  %v1402 = vld [vmem:[%s1401] sm:$0x3]
  %v1403 = vadd.f32 %v1402, %v1399
  %v1404 = vxor.u32 %v1403, 2147483648
  %v1405 = vmul.f32 %v1404, 1.442695
  %v1406 = vpow.pop %v1405
  %v1407 = vadd.f32 %v1406, 1.0
  %v1408 = vrcp.pop %v1407
  %v1409 = vmul.f32 %v1407, %v1408
  %v1410 = vsub.f32 1.0, %v1409
  %v1411 = vmul.f32 %v1408, %v1410
  %v1412 = vadd.f32 %v1408, %v1411
  %vm1413 = vweird.f32 %v1407
  %vm1414 = vweird.f32 %v1408
  %vm1415 = vmor %vm1413, %vm1414
  %v1416 = vsel %vm1415, %v1408, %v1412
  %v1417 = vand.u32 2147483647, %v1407
  %vm1418 = vcmp.eq.f32.partialorder %v1417, 8.507059e+37
  %v1419 = vand.u32 %v1407, 2147483648
  %v1420 = vor.u32 1.1754944e-38, %v1419
  %v1421 = vsel %vm1418, %v1420, %v1416
  %v1422 = vmul.f32 1.0, %v1421
  %v1423 = vtanh.pop %v1403
  %v1424 = vmul.f32 %v1422, %v1366
  %1426 = vrot.lane.b32.xlu0 %v1423, 64
  %v1427 = vpop.permute.xlu0 %1426
  %v1429 = vmul.f32 %v1422, %v1427
  %1431 = vrot.lane.b32.xlu0 %v1429, 32
  %v1432 = vpop.permute.xlu0 %1431
  %v1434 = vadd.f32 %v1424, %v1432
  %v1435 = vtanh.pop %v1434
  %1437 = vrot.lane.b32.xlu0 %v1435, 64
  %v1438 = vpop.permute.xlu0 %1437
  %v1440 = vmul.f32 %v1422, %v1438
  %1442 = vrot.lane.b32.xlu0 %v1440, 32
  %v1443 = vpop.permute.xlu0 %1442
  %s1445 = scalar_lea.vmem %s2, 40
  %1446 = vst.msk [vmem:[%s1445] sm:$0x3] %vm85, %v1443
  %v1447 = vsel %vm18, %v1443, 0
  %1449 = vmatpush.msra.mxu0 0.0
  %1450 = vmatpush.msra.mxu0 0.0
  %1451 = vmatpush.msra.mxu0 0.0
  %1452 = vmatpush.msra.mxu0 0.0
  %1453 = vmatpush.msra.mxu0 0.0
  %1454 = vmatpush.msra.mxu0 0.0
  %1455 = vmatpush.msra.mxu0 0.0
  %1456 = vmatpush.msra.mxu0 0.0
  %1457 = vmatpush.msra.mxu0 0.0
  %1458 = vmatpush.msra.mxu0 0.0
  %1459 = vmatpush.msra.mxu0 0.0
  %1460 = vmatpush.msra.mxu0 0.0
  %1461 = vmatpush.msra.mxu0 %v17
  %1462 = vmatpush.msra.mxu0 %v16
  %1463 = vmatpush.msra.mxu0 %v15
  %1464 = vmatpush.msra.mxu0 %v14
  %1465 = vmatmul.f32.gmra.mxu0 %v1447
  %v1466 = vpop.f32.mrf.mxu0
  %v1467 = vadd.f32 0.0, %v1466
  %1468 = vdwg.mxu0
  %s1469 = scalar_lea.vmem %s0, 42
  %v1470 = vld [vmem:[%s1469] sm:$0x3]
  %v1471 = vadd.f32 %v1470, %v1467
  %v1472 = vxor.u32 %v1471, 2147483648
  %v1473 = vmul.f32 %v1472, 1.442695
  %v1474 = vpow.pop %v1473
  %v1475 = vadd.f32 %v1474, 1.0
  %v1476 = vrcp.pop %v1475
  %v1477 = vmul.f32 %v1475, %v1476
  %v1478 = vsub.f32 1.0, %v1477
  %v1479 = vmul.f32 %v1476, %v1478
  %v1480 = vadd.f32 %v1476, %v1479
  %vm1481 = vweird.f32 %v1475
  %vm1482 = vweird.f32 %v1476
  %vm1483 = vmor %vm1481, %vm1482
  %v1484 = vsel %vm1483, %v1476, %v1480
  %v1485 = vand.u32 2147483647, %v1475
  %vm1486 = vcmp.eq.f32.partialorder %v1485, 8.507059e+37
  %v1487 = vand.u32 %v1475, 2147483648
  %v1488 = vor.u32 1.1754944e-38, %v1487
  %v1489 = vsel %vm1486, %v1488, %v1484
  %v1490 = vmul.f32 1.0, %v1489
  %v1491 = vtanh.pop %v1471
  %v1492 = vmul.f32 %v1490, %v1434
  %1494 = vrot.lane.b32.xlu0 %v1491, 64
  %v1495 = vpop.permute.xlu0 %1494
  %v1497 = vmul.f32 %v1490, %v1495
  %1499 = vrot.lane.b32.xlu0 %v1497, 32
  %v1500 = vpop.permute.xlu0 %1499
  %v1502 = vadd.f32 %v1492, %v1500
  %v1503 = vtanh.pop %v1502
  %1505 = vrot.lane.b32.xlu0 %v1503, 64
  %v1506 = vpop.permute.xlu0 %1505
  %v1508 = vmul.f32 %v1490, %v1506
  %1510 = vrot.lane.b32.xlu0 %v1508, 32
  %v1511 = vpop.permute.xlu0 %1510
  %s1513 = scalar_lea.vmem %s2, 42
  %1514 = vst.msk [vmem:[%s1513] sm:$0x3] %vm85, %v1511
  %v1515 = vsel %vm18, %v1511, 0
  %1517 = vmatpush.msra.mxu0 0.0
  %1518 = vmatpush.msra.mxu0 0.0
  %1519 = vmatpush.msra.mxu0 0.0
  %1520 = vmatpush.msra.mxu0 0.0
  %1521 = vmatpush.msra.mxu0 0.0
  %1522 = vmatpush.msra.mxu0 0.0
  %1523 = vmatpush.msra.mxu0 0.0
  %1524 = vmatpush.msra.mxu0 0.0
  %1525 = vmatpush.msra.mxu0 0.0
  %1526 = vmatpush.msra.mxu0 0.0
  %1527 = vmatpush.msra.mxu0 0.0
  %1528 = vmatpush.msra.mxu0 0.0
  %1529 = vmatpush.msra.mxu0 %v17
  %1530 = vmatpush.msra.mxu0 %v16
  %1531 = vmatpush.msra.mxu0 %v15
  %1532 = vmatpush.msra.mxu0 %v14
  %1533 = vmatmul.f32.gmra.mxu0 %v1515
  %v1534 = vpop.f32.mrf.mxu0
  %v1535 = vadd.f32 0.0, %v1534
  %1536 = vdwg.mxu0
  %s1537 = scalar_lea.vmem %s0, 44
  %v1538 = vld [vmem:[%s1537] sm:$0x3]
  %v1539 = vadd.f32 %v1538, %v1535
  %v1540 = vxor.u32 %v1539, 2147483648
  %v1541 = vmul.f32 %v1540, 1.442695
  %v1542 = vpow.pop %v1541
  %v1543 = vadd.f32 %v1542, 1.0
  %v1544 = vrcp.pop %v1543
  %v1545 = vmul.f32 %v1543, %v1544
  %v1546 = vsub.f32 1.0, %v1545
  %v1547 = vmul.f32 %v1544, %v1546
  %v1548 = vadd.f32 %v1544, %v1547
  %vm1549 = vweird.f32 %v1543
  %vm1550 = vweird.f32 %v1544
  %vm1551 = vmor %vm1549, %vm1550
  %v1552 = vsel %vm1551, %v1544, %v1548
  %v1553 = vand.u32 2147483647, %v1543
  %vm1554 = vcmp.eq.f32.partialorder %v1553, 8.507059e+37
  %v1555 = vand.u32 %v1543, 2147483648
  %v1556 = vor.u32 1.1754944e-38, %v1555
  %v1557 = vsel %vm1554, %v1556, %v1552
  %v1558 = vmul.f32 1.0, %v1557
  %v1559 = vtanh.pop %v1539
  %v1560 = vmul.f32 %v1558, %v1502
  %1562 = vrot.lane.b32.xlu0 %v1559, 64
  %v1563 = vpop.permute.xlu0 %1562
  %v1565 = vmul.f32 %v1558, %v1563
  %1567 = vrot.lane.b32.xlu0 %v1565, 32
  %v1568 = vpop.permute.xlu0 %1567
  %v1570 = vadd.f32 %v1560, %v1568
  %v1571 = vtanh.pop %v1570
  %1573 = vrot.lane.b32.xlu0 %v1571, 64
  %v1574 = vpop.permute.xlu0 %1573
  %v1576 = vmul.f32 %v1558, %v1574
  %1578 = vrot.lane.b32.xlu0 %v1576, 32
  %v1579 = vpop.permute.xlu0 %1578
  %s1581 = scalar_lea.vmem %s2, 44
  %1582 = vst.msk [vmem:[%s1581] sm:$0x3] %vm85, %v1579
  %v1583 = vsel %vm18, %v1579, 0
  %1585 = vmatpush.msra.mxu0 0.0
  %1586 = vmatpush.msra.mxu0 0.0
  %1587 = vmatpush.msra.mxu0 0.0
  %1588 = vmatpush.msra.mxu0 0.0
  %1589 = vmatpush.msra.mxu0 0.0
  %1590 = vmatpush.msra.mxu0 0.0
  %1591 = vmatpush.msra.mxu0 0.0
  %1592 = vmatpush.msra.mxu0 0.0
  %1593 = vmatpush.msra.mxu0 0.0
  %1594 = vmatpush.msra.mxu0 0.0
  %1595 = vmatpush.msra.mxu0 0.0
  %1596 = vmatpush.msra.mxu0 0.0
  %1597 = vmatpush.msra.mxu0 %v17
  %1598 = vmatpush.msra.mxu0 %v16
  %1599 = vmatpush.msra.mxu0 %v15
  %1600 = vmatpush.msra.mxu0 %v14
  %1601 = vmatmul.f32.gmra.mxu0 %v1583
  %v1602 = vpop.f32.mrf.mxu0
  %v1603 = vadd.f32 0.0, %v1602
  %1604 = vdwg.mxu0
  %s1605 = scalar_lea.vmem %s0, 46
  %v1606 = vld [vmem:[%s1605] sm:$0x3]
  %v1607 = vadd.f32 %v1606, %v1603
  %v1608 = vxor.u32 %v1607, 2147483648
  %v1609 = vmul.f32 %v1608, 1.442695
  %v1610 = vpow.pop %v1609
  %v1611 = vadd.f32 %v1610, 1.0
  %v1612 = vrcp.pop %v1611
  %v1613 = vmul.f32 %v1611, %v1612
  %v1614 = vsub.f32 1.0, %v1613
  %v1615 = vmul.f32 %v1612, %v1614
  %v1616 = vadd.f32 %v1612, %v1615
  %vm1617 = vweird.f32 %v1611
  %vm1618 = vweird.f32 %v1612
  %vm1619 = vmor %vm1617, %vm1618
  %v1620 = vsel %vm1619, %v1612, %v1616
  %v1621 = vand.u32 2147483647, %v1611
  %vm1622 = vcmp.eq.f32.partialorder %v1621, 8.507059e+37
  %v1623 = vand.u32 %v1611, 2147483648
  %v1624 = vor.u32 1.1754944e-38, %v1623
  %v1625 = vsel %vm1622, %v1624, %v1620
  %v1626 = vmul.f32 1.0, %v1625
  %v1627 = vtanh.pop %v1607
  %v1628 = vmul.f32 %v1626, %v1570
  %1630 = vrot.lane.b32.xlu0 %v1627, 64
  %v1631 = vpop.permute.xlu0 %1630
  %v1633 = vmul.f32 %v1626, %v1631
  %1635 = vrot.lane.b32.xlu0 %v1633, 32
  %v1636 = vpop.permute.xlu0 %1635
  %v1638 = vadd.f32 %v1628, %v1636
  %v1639 = vtanh.pop %v1638
  %1641 = vrot.lane.b32.xlu0 %v1639, 64
  %v1642 = vpop.permute.xlu0 %1641
  %v1644 = vmul.f32 %v1626, %v1642
  %1646 = vrot.lane.b32.xlu0 %v1644, 32
  %v1647 = vpop.permute.xlu0 %1646
  %s1649 = scalar_lea.vmem %s2, 46
  %1650 = vst.msk [vmem:[%s1649] sm:$0x3] %vm85, %v1647
  %1651 = vst.msk [vmem:[%s3] sm:$0x3] %vm85, %v1647
  %1653 = vrot.lane.b32.xlu0 %v1638, 96
  %v1654 = vpop.permute.xlu0 %1653
  %1656 = vst.msk [vmem:[%s4] sm:$0x3] %vm85, %v1654
  // Predicated region
  $region10: #{encoder_forward.1} parent=0 // pred_check
    _
  $region11: #{encoder_forward.1} parent=0 // pred_check_branch
    %1658 = sbr.rel (0) target = $region13
  $region12: #{encoder_forward.1} parent=0 // pred_region
    _
  $region13: #{encoder_forward.1} parent=0 // pred_fallthru
    _
  // Predicated region
  $region14: #{encoder_forward.1} parent=0 // pred_check
    _
  $region15: #{encoder_forward.1} parent=0 // pred_check_branch
    %1660 = sbr.rel (0) target = $region17
  $region16: #{encoder_forward.1} parent=0 // pred_region
    _
  $region17: #{encoder_forward.1} parent=0 // pred_fallthru
    _
  // Predicated region
  $region18: #{encoder_forward.1} parent=0 // pred_check
    _
  $region19: #{encoder_forward.1} parent=0 // pred_check_branch
    %1662 = sbr.rel (0) target = $region21
  $region20: #{encoder_forward.1} parent=0 // pred_region
    _
  $region21: #{encoder_forward.1} parent=0 // pred_fallthru
    _
  // Predicated region
  $region22: #{encoder_forward.1} parent=0 // pred_check
    _
  $region23: #{encoder_forward.1} parent=0 // pred_check_branch
    %1664 = sbr.rel (0) target = $region25
  $region24: #{encoder_forward.1} parent=0 // pred_region
    _
  $region25: #{encoder_forward.1} parent=0 // pred_fallthru
    _
  // Predicated region
  $region26: #{encoder_forward.1} parent=0 // pred_check
    _
  $region27: #{encoder_forward.1} parent=0 // pred_check_branch
    %1666 = sbr.rel (0) target = $region29
  $region28: #{encoder_forward.1} parent=0 // pred_region
    _
  $region29: #{encoder_forward.1} parent=0 // pred_fallthru
    _
  // Predicated region
  $region30: #{encoder_forward.1} parent=0 // pred_check
    _
  $region31: #{encoder_forward.1} parent=0 // pred_check_branch
    %1668 = sbr.rel (0) target = $region33
  $region32: #{encoder_forward.1} parent=0 // pred_region
    _
  $region33: #{encoder_forward.1} parent=0 // pred_fallthru
    _

</llo_original>
